<compile_context>
chip_gen: v7x
topology: tpu7x:2x2x1
jax: 0.10.0
libtpu: 0.0.40
codegen_flags: <defaults>
</compile_context>

<pallas_src>
import functools

import jax
import jax.numpy as jnp
from jax import lax
from jax.experimental import pallas as pl
from jax.experimental.pallas import tpu as pltpu


def _db_head_kernel(xt_ref, w1_ref, s1_ref, t1_ref, w2_ref, s2_ref, t2_ref,
                    w3_ref, b3_ref, out_ref, *, TH, W, Cin):
    xp = xt_ref[0]                                   # (TH+2, W+2, Cin) bf16
    P = TH * W

    # ---- Conv2d 3x3, pad=1, no bias: single im2col matmul, K = 9*Cin ----
    taps = []
    for dh in range(3):
        rows = xp[dh:dh + TH]                        # (TH, W+2, Cin)
        for dw in range(3):
            taps.append(rows[:, dw:dw + W, :])       # (TH, W, Cin)
    lhs = jnp.concatenate(taps, axis=-1).reshape(P, 9 * Cin)      # (P, 9*Cin) bf16
    acc1 = jnp.dot(lhs, w1_ref[...],
                   preferred_element_type=jnp.float32)            # (P, Cmid) f32

    # ---- BatchNorm (folded scale/shift) + ReLU ----
    h1 = jnp.maximum(acc1 * s1_ref[...] + t1_ref[...], 0.0)       # (P, Cmid) f32

    # ---- ConvTranspose2d(2,2) #1: one wide matmul over the 4 sub-grids, + BN + ReLU ----
    acc2 = jnp.dot(h1.astype(jnp.bfloat16), w2_ref[...],
                   preferred_element_type=jnp.float32)            # (P, 4*Cmid) f32
    h2 = jnp.maximum(acc2 * s2_ref[...] + t2_ref[...], 0.0)       # b2 folded into t2

    # ---- ConvTranspose2d(2,2) #2: one block-diagonal matmul -> 16 sub-grid channels ----
    acc3 = jnp.dot(h2.astype(jnp.bfloat16), w3_ref[...],
                   preferred_element_type=jnp.float32)            # (P, 16) f32
    res = jax.nn.sigmoid(acc3 + b3_ref[0])                        # b3 scalar from SMEM

    # channel q = 8a + 4b + 2c + d  ->  output position (4i+2a+c, 4j+2b+d)
    out_ref[0] = res.reshape(TH, W, 16)


def db_head_forward(x_nchw, p, *, tile_h=None):
    """Pallas forward. x_nchw: (N, Cin, H, W) float32 -> (N, 1, 4H, 4W)."""
    N, Cin, H, W = x_nchw.shape
    Cmid = Cin // 4
    eps = 1e-5

    TH = tile_h if tile_h is not None else (8 if H % 8 == 0 else H)
    assert H % TH == 0
    nH = H // TH
    G = N * nH

    # --- input: NHWC, pad by 1, cut into overlapping row slabs (1-row halo) ---
    x = jnp.transpose(x_nchw, (0, 2, 3, 1)).astype(jnp.float32)    # (N, H, W, Cin)
    xpad = jnp.pad(x, ((0, 0), (1, 1), (1, 1), (0, 0)))
    tiles = jnp.stack([xpad[:, t * TH:t * TH + TH + 2] for t in range(nH)],
                      axis=1)                                      # (N, nH, TH+2, W+2, Cin)
    tiles = tiles.reshape(G, TH + 2, W + 2, Cin).astype(jnp.bfloat16)

    # --- conv weights: im2col layout (dh, dw, cin) along K ---
    w1 = jnp.transpose(p["w1"], (2, 3, 1, 0)).reshape(9 * Cin, Cmid)
    w1 = w1.astype(jnp.bfloat16)
    inv1 = p["g1"] * lax.rsqrt(p["v1"] + eps)
    s1 = inv1.reshape(1, Cmid).astype(jnp.float32)
    t1 = (p["be1"] - p["m1"] * inv1).reshape(1, Cmid).astype(jnp.float32)

    # --- deconv1 weights stacked over the 4 sub-grids (ab = 2a+b) ---
    w2 = jnp.transpose(p["w2"], (0, 2, 3, 1)).reshape(Cmid, 4 * Cmid)
    w2 = w2.astype(jnp.bfloat16)
    inv2 = p["g2"] * lax.rsqrt(p["v2"] + eps)
    s2 = jnp.tile(inv2, 4).reshape(1, 4 * Cmid).astype(jnp.float32)
    t2 = jnp.tile(p["be2"] + (p["b2"] - p["m2"]) * inv2, 4)
    t2 = t2.reshape(1, 4 * Cmid).astype(jnp.float32)

    # --- deconv2 weights as a block-diagonal RHS: column q = 4*ab + (2c+d) ---
    w3s = p["w3"].reshape(Cmid, 4)                                 # (Cmid, cd)
    w3bd = jnp.kron(jnp.eye(4, dtype=w3s.dtype), w3s).astype(jnp.bfloat16)  # (4*Cmid, 16)
    b3 = p["b3"].reshape(1).astype(jnp.float32)                    # scalar, lives in SMEM

    kernel = functools.partial(_db_head_kernel, TH=TH, W=W, Cin=Cin)

    def full(shape):
        return pl.BlockSpec(shape, lambda g, _s=shape: (0,) * len(_s))

    subs = pl.pallas_call(
        kernel,
        out_shape=jax.ShapeDtypeStruct((G, TH, W, 16), jnp.float32),
        grid_spec=pltpu.PrefetchScalarGridSpec(
            num_scalar_prefetch=0,
            grid=(G,),
            in_specs=[
                pl.BlockSpec((1, TH + 2, W + 2, Cin), lambda g: (g, 0, 0, 0)),
                full((9 * Cin, Cmid)),
                full((1, Cmid)), full((1, Cmid)),
                full((Cmid, 4 * Cmid)),
                full((1, 4 * Cmid)), full((1, 4 * Cmid)),
                full((4 * Cmid, 16)),
                pl.BlockSpec(memory_space=pltpu.MemorySpace.SMEM),
            ],
            out_specs=pl.BlockSpec((1, TH, W, 16), lambda g: (g, 0, 0, 0)),
        ),
        compiler_params=pltpu.CompilerParams(
            dimension_semantics=("parallel",),
            vmem_limit_bytes=48 * 1024 * 1024),
    )(tiles, w1, s1, t1, w2, s2, t2, w3bd, b3)

    # Reassemble row slabs, then interleave the 16 sub-grids:
    # out[n, 4i+2a+c, 4j+2b+d] = subs[n, i, j, 8a+4b+2c+d]   (pure layout)
    subs = subs.reshape(N, H, W, 16)
    y = subs.reshape(N, H, W, 2, 2, 2, 2)            # (n, i, j, a, b, c, d)
    y = jnp.transpose(y, (0, 1, 3, 5, 2, 4, 6))      # (n, i, a, c, j, b, d)
    y = y.reshape(N, 4 * H, 4 * W)
    return y[:, None, :, :]                          # NCHW, C=1


def reference_forward(x_nchw, p):
    """Pure-JAX reference (lax convs) with PyTorch semantics, eval-mode BN."""
    eps = 1e-5
    hp = lax.Precision.HIGHEST

    def bn(y, g, be, m, v):
        sc = (g / jnp.sqrt(v + eps))[None, :, None, None]
        sh = (be - m * g / jnp.sqrt(v + eps))[None, :, None, None]
        return y * sc + sh

    h = lax.conv_general_dilated(
        x_nchw, p["w1"], (1, 1), ((1, 1), (1, 1)),
        dimension_numbers=("NCHW", "OIHW", "NCHW"), precision=hp)
    h = jax.nn.relu(bn(h, p["g1"], p["be1"], p["m1"], p["v1"]))

    wt2 = jnp.transpose(jnp.flip(p["w2"], (2, 3)), (1, 0, 2, 3))
    h = lax.conv_general_dilated(
        h, wt2, (1, 1), ((1, 1), (1, 1)), lhs_dilation=(2, 2),
        dimension_numbers=("NCHW", "OIHW", "NCHW"), precision=hp)
    h = h + p["b2"][None, :, None, None]
    h = jax.nn.relu(bn(h, p["g2"], p["be2"], p["m2"], p["v2"]))

    wt3 = jnp.transpose(jnp.flip(p["w3"], (2, 3)), (1, 0, 2, 3))
    h = lax.conv_general_dilated(
        h, wt3, (1, 1), ((1, 1), (1, 1)), lhs_dilation=(2, 2),
        dimension_numbers=("NCHW", "OIHW", "NCHW"), precision=hp)
    h = h + p["b3"][None, :, None, None]
    return jax.nn.sigmoid(h)


if __name__ == "__main__":
    N, Cin, H, W = 2, 16, 16, 16
    Cmid = Cin // 4

    key = jax.random.PRNGKey(0)
    ks = jax.random.split(key, 16)
    f32 = jnp.float32
    params = {
        "w1": jax.random.normal(ks[0], (Cmid, Cin, 3, 3), f32) * 0.1,
        "g1": jax.random.uniform(ks[1], (Cmid,), f32, 0.5, 1.5),
        "be1": jax.random.normal(ks[2], (Cmid,), f32) * 0.1,
        "m1": jax.random.normal(ks[3], (Cmid,), f32) * 0.1,
        "v1": jax.random.uniform(ks[4], (Cmid,), f32, 0.5, 1.5),
        "w2": jax.random.normal(ks[5], (Cmid, Cmid, 2, 2), f32) * 0.2,
        "b2": jax.random.normal(ks[6], (Cmid,), f32) * 0.1,
        "g2": jax.random.uniform(ks[7], (Cmid,), f32, 0.5, 1.5),
        "be2": jax.random.normal(ks[8], (Cmid,), f32) * 0.1,
        "m2": jax.random.normal(ks[9], (Cmid,), f32) * 0.1,
        "v2": jax.random.uniform(ks[10], (Cmid,), f32, 0.5, 1.5),
        "w3": jax.random.normal(ks[11], (Cmid, 1, 2, 2), f32) * 0.2,
        "b3": jax.random.normal(ks[12], (1,), f32) * 0.1,
    }
    x = jax.random.normal(ks[13], (N, Cin, H, W), f32)

    out = db_head_forward(x, params)
    out = jax.block_until_ready(out)
    assert out.shape == (N, 1, 4 * H, 4 * W), out.shape

    ref = jax.block_until_ready(reference_forward(x, params))
    err = float(jnp.max(jnp.abs(out - ref)))
    # Matmul operands are bf16 (f32 accumulation): expected error is O(1e-3);
    # structural/layout errors would be O(0.1+).
    assert err < 2e-2, f"max abs error {err}"

    print("KERNEL_OK")
</pallas_src>

<mosaic_0001>
module attributes {stable_mosaic.version = 11 : i64} {
  func.func @_db_head_kernel(%arg0: i32, %arg1: memref<1x10x18x16xbf16, #tpu.memory_space<vmem>>, %arg2: memref<144x4xbf16, #tpu.memory_space<vmem>>, %arg3: memref<1x4xf32, #tpu.memory_space<vmem>>, %arg4: memref<1x4xf32, #tpu.memory_space<vmem>>, %arg5: memref<4x16xbf16, #tpu.memory_space<vmem>>, %arg6: memref<1x16xf32, #tpu.memory_space<vmem>>, %arg7: memref<1x16xf32, #tpu.memory_space<vmem>>, %arg8: memref<16x16xbf16, #tpu.memory_space<vmem>>, %arg9: memref<1xf32, #tpu.memory_space<smem>>, %arg10: memref<1x8x16x16xf32, #tpu.memory_space<vmem>>) attributes {dimension_semantics = [#tpu.dimension_semantics<parallel>], iteration_bounds = array<i64: 4>, scalar_prefetch = 0 : i64, scratch_operands = 0 : i64, tpu.core_type = #tpu.core_type<tc>, window_params = [{transform_indices = @transform_0, window_bounds = array<i64: 1, 10, 18, 16>}, {pipeline_mode = #tpu.pipeline_mode<synchronous>, transform_indices = @transform_1, window_bounds = array<i64: 144, 4>}, {pipeline_mode = #tpu.pipeline_mode<synchronous>, transform_indices = @transform_2, window_bounds = array<i64: 1, 4>}, {pipeline_mode = #tpu.pipeline_mode<synchronous>, transform_indices = @transform_3, window_bounds = array<i64: 1, 4>}, {pipeline_mode = #tpu.pipeline_mode<synchronous>, transform_indices = @transform_4, window_bounds = array<i64: 4, 16>}, {pipeline_mode = #tpu.pipeline_mode<synchronous>, transform_indices = @transform_5, window_bounds = array<i64: 1, 16>}, {pipeline_mode = #tpu.pipeline_mode<synchronous>, transform_indices = @transform_6, window_bounds = array<i64: 1, 16>}, {pipeline_mode = #tpu.pipeline_mode<synchronous>, transform_indices = @transform_7, window_bounds = array<i64: 16, 16>}, {transform_indices = @transform_8, window_bounds = array<i64: 1>}, {transform_indices = @transform_9, window_bounds = array<i64: 1, 8, 16, 16>}]} {
    %c0 = arith.constant 0 : index
    %c0_0 = arith.constant 0 : index
    %c0_1 = arith.constant 0 : index
    %c0_2 = arith.constant 0 : index
    %0 = vector.load %arg1[%c0, %c0_0, %c0_1, %c0_2] : memref<1x10x18x16xbf16, #tpu.memory_space<vmem>>, vector<1x10x18x16xbf16>
    %1 = vector.shape_cast %0 : vector<1x10x18x16xbf16> to vector<10x18x16xbf16>
    %2 = vector.extract_strided_slice %1 {offsets = [0, 0, 0], sizes = [8, 18, 16], strides = [1, 1, 1]} : vector<10x18x16xbf16> to vector<8x18x16xbf16>
    %3 = vector.extract_strided_slice %2 {offsets = [0, 0, 0], sizes = [8, 16, 16], strides = [1, 1, 1]} : vector<8x18x16xbf16> to vector<8x16x16xbf16>
    %4 = vector.extract_strided_slice %2 {offsets = [0, 1, 0], sizes = [8, 16, 16], strides = [1, 1, 1]} : vector<8x18x16xbf16> to vector<8x16x16xbf16>
    %5 = vector.extract_strided_slice %2 {offsets = [0, 2, 0], sizes = [8, 16, 16], strides = [1, 1, 1]} : vector<8x18x16xbf16> to vector<8x16x16xbf16>
    %6 = vector.extract_strided_slice %1 {offsets = [1, 0, 0], sizes = [8, 18, 16], strides = [1, 1, 1]} : vector<10x18x16xbf16> to vector<8x18x16xbf16>
    %7 = vector.extract_strided_slice %6 {offsets = [0, 0, 0], sizes = [8, 16, 16], strides = [1, 1, 1]} : vector<8x18x16xbf16> to vector<8x16x16xbf16>
    %8 = vector.extract_strided_slice %6 {offsets = [0, 1, 0], sizes = [8, 16, 16], strides = [1, 1, 1]} : vector<8x18x16xbf16> to vector<8x16x16xbf16>
    %9 = vector.extract_strided_slice %6 {offsets = [0, 2, 0], sizes = [8, 16, 16], strides = [1, 1, 1]} : vector<8x18x16xbf16> to vector<8x16x16xbf16>
    %10 = vector.extract_strided_slice %1 {offsets = [2, 0, 0], sizes = [8, 18, 16], strides = [1, 1, 1]} : vector<10x18x16xbf16> to vector<8x18x16xbf16>
    %11 = vector.extract_strided_slice %10 {offsets = [0, 0, 0], sizes = [8, 16, 16], strides = [1, 1, 1]} : vector<8x18x16xbf16> to vector<8x16x16xbf16>
    %12 = vector.extract_strided_slice %10 {offsets = [0, 1, 0], sizes = [8, 16, 16], strides = [1, 1, 1]} : vector<8x18x16xbf16> to vector<8x16x16xbf16>
    %13 = vector.extract_strided_slice %10 {offsets = [0, 2, 0], sizes = [8, 16, 16], strides = [1, 1, 1]} : vector<8x18x16xbf16> to vector<8x16x16xbf16>
    %14 = tpu.concatenate %3, %4, %5, %7, %8, %9, %11, %12, %13 in 2 : vector<8x16x16xbf16>, vector<8x16x16xbf16>, vector<8x16x16xbf16>, vector<8x16x16xbf16>, vector<8x16x16xbf16>, vector<8x16x16xbf16>, vector<8x16x16xbf16>, vector<8x16x16xbf16>, vector<8x16x16xbf16> -> vector<8x16x144xbf16>
    %15 = vector.shape_cast %14 : vector<8x16x144xbf16> to vector<128x144xbf16>
    %c0_3 = arith.constant 0 : index
    %c0_4 = arith.constant 0 : index
    %16 = vector.load %arg2[%c0_3, %c0_4] : memref<144x4xbf16, #tpu.memory_space<vmem>>, vector<144x4xbf16>
    %cst = arith.constant dense<0.000000e+00> : vector<128x4xf32>
    %17 = tpu.matmul %15, %16, %cst {dimension_numbers = #tpu.dot_dimension_numbers<[1], [0], [0], [1], [0, 0, 1, 1], [], []>} : vector<128x144xbf16>, vector<144x4xbf16>, vector<128x4xf32> -> vector<128x4xf32>
    %c0_5 = arith.constant 0 : index
    %c0_6 = arith.constant 0 : index
    %18 = vector.load %arg3[%c0_5, %c0_6] : memref<1x4xf32, #tpu.memory_space<vmem>>, vector<1x4xf32>
    %19 = vector.broadcast %18 : vector<1x4xf32> to vector<128x4xf32>
    %20 = arith.mulf %17, %19 : vector<128x4xf32>
    %c0_7 = arith.constant 0 : index
    %c0_8 = arith.constant 0 : index
    %21 = vector.load %arg4[%c0_7, %c0_8] : memref<1x4xf32, #tpu.memory_space<vmem>>, vector<1x4xf32>
    %22 = vector.broadcast %21 : vector<1x4xf32> to vector<128x4xf32>
    %23 = arith.addf %20, %22 : vector<128x4xf32>
    %cst_9 = arith.constant 0.000000e+00 : f32
    %24 = vector.broadcast %cst_9 : f32 to vector<128x4xf32>
    %25 = arith.maximumf %23, %24 : vector<128x4xf32>
    %26 = arith.truncf %25 : vector<128x4xf32> to vector<128x4xbf16>
    %c0_10 = arith.constant 0 : index
    %c0_11 = arith.constant 0 : index
    %27 = vector.load %arg5[%c0_10, %c0_11] : memref<4x16xbf16, #tpu.memory_space<vmem>>, vector<4x16xbf16>
    %cst_12 = arith.constant dense<0.000000e+00> : vector<128x16xf32>
    %28 = tpu.matmul %26, %27, %cst_12 {dimension_numbers = #tpu.dot_dimension_numbers<[1], [0], [0], [1], [0, 0, 1, 1], [], []>} : vector<128x4xbf16>, vector<4x16xbf16>, vector<128x16xf32> -> vector<128x16xf32>
    %c0_13 = arith.constant 0 : index
    %c0_14 = arith.constant 0 : index
    %29 = vector.load %arg6[%c0_13, %c0_14] : memref<1x16xf32, #tpu.memory_space<vmem>>, vector<1x16xf32>
    %30 = vector.broadcast %29 : vector<1x16xf32> to vector<128x16xf32>
    %31 = arith.mulf %28, %30 : vector<128x16xf32>
    %c0_15 = arith.constant 0 : index
    %c0_16 = arith.constant 0 : index
    %32 = vector.load %arg7[%c0_15, %c0_16] : memref<1x16xf32, #tpu.memory_space<vmem>>, vector<1x16xf32>
    %33 = vector.broadcast %32 : vector<1x16xf32> to vector<128x16xf32>
    %34 = arith.addf %31, %33 : vector<128x16xf32>
    %cst_17 = arith.constant 0.000000e+00 : f32
    %35 = vector.broadcast %cst_17 : f32 to vector<128x16xf32>
    %36 = arith.maximumf %34, %35 : vector<128x16xf32>
    %37 = arith.truncf %36 : vector<128x16xf32> to vector<128x16xbf16>
    %c0_18 = arith.constant 0 : index
    %c0_19 = arith.constant 0 : index
    %38 = vector.load %arg8[%c0_18, %c0_19] : memref<16x16xbf16, #tpu.memory_space<vmem>>, vector<16x16xbf16>
    %cst_20 = arith.constant dense<0.000000e+00> : vector<128x16xf32>
    %39 = tpu.matmul %37, %38, %cst_20 {dimension_numbers = #tpu.dot_dimension_numbers<[1], [0], [0], [1], [0, 0, 1, 1], [], []>} : vector<128x16xbf16>, vector<16x16xbf16>, vector<128x16xf32> -> vector<128x16xf32>
    %c0_21 = arith.constant 0 : index
    %40 = memref.load %arg9[%c0_21] : memref<1xf32, #tpu.memory_space<smem>>
    %41 = vector.broadcast %40 : f32 to vector<128x16xf32>
    %42 = arith.addf %39, %41 : vector<128x16xf32>
    %43 = arith.negf %42 : vector<128x16xf32>
    %44 = math.exp %43 : vector<128x16xf32>
    %cst_22 = arith.constant 1.000000e+00 : f32
    %45 = vector.broadcast %cst_22 : f32 to vector<128x16xf32>
    %46 = arith.addf %45, %44 : vector<128x16xf32>
    %47 = arith.divf %45, %46 : vector<128x16xf32>
    %48 = vector.shape_cast %47 : vector<128x16xf32> to vector<8x16x16xf32>
    %c0_23 = arith.constant 0 : index
    %c0_24 = arith.constant 0 : index
    %c0_25 = arith.constant 0 : index
    %c0_26 = arith.constant 0 : index
    %49 = vector.load %arg10[%c0_23, %c0_24, %c0_25, %c0_26] : memref<1x8x16x16xf32, #tpu.memory_space<vmem>>, vector<1x8x16x16xf32>
    %50 = vector.shape_cast %49 : vector<1x8x16x16xf32> to vector<8x16x16xf32>
    %51 = vector.shape_cast %48 : vector<8x16x16xf32> to vector<1x8x16x16xf32>
    tpu.vector_store %arg10[%c0_23, %c0_24, %c0_25, %c0_26], %51 {strides = array<i32>} : memref<1x8x16x16xf32, #tpu.memory_space<vmem>>, vector<1x8x16x16xf32>,
    return
  }
  func.func @transform_0(%arg0: i32) -> (i32, i32, i32, i32) {
    %c0_i32 = arith.constant 0 : i32
    %c0_i32_0 = arith.constant 0 : i32
    %c0_i32_1 = arith.constant 0 : i32
    %c0_i32_2 = arith.constant 0 : i32
    return %arg0, %c0_i32, %c0_i32_0, %c0_i32_1 : i32, i32, i32, i32
  }
  func.func @transform_1(%arg0: i32) -> (i32, i32) {
    %c0_i32 = arith.constant 0 : i32
    %c0_i32_0 = arith.constant 0 : i32
    %c0_i32_1 = arith.constant 0 : i32
    return %c0_i32, %c0_i32_0 : i32, i32
  }
  func.func @transform_2(%arg0: i32) -> (i32, i32) {
    %c0_i32 = arith.constant 0 : i32
    %c0_i32_0 = arith.constant 0 : i32
    %c0_i32_1 = arith.constant 0 : i32
    return %c0_i32, %c0_i32_0 : i32, i32
  }
  func.func @transform_3(%arg0: i32) -> (i32, i32) {
    %c0_i32 = arith.constant 0 : i32
    %c0_i32_0 = arith.constant 0 : i32
    %c0_i32_1 = arith.constant 0 : i32
    return %c0_i32, %c0_i32_0 : i32, i32
  }
  func.func @transform_4(%arg0: i32) -> (i32, i32) {
    %c0_i32 = arith.constant 0 : i32
    %c0_i32_0 = arith.constant 0 : i32
    %c0_i32_1 = arith.constant 0 : i32
    return %c0_i32, %c0_i32_0 : i32, i32
  }
  func.func @transform_5(%arg0: i32) -> (i32, i32) {
    %c0_i32 = arith.constant 0 : i32
    %c0_i32_0 = arith.constant 0 : i32
    %c0_i32_1 = arith.constant 0 : i32
    return %c0_i32, %c0_i32_0 : i32, i32
  }
  func.func @transform_6(%arg0: i32) -> (i32, i32) {
    %c0_i32 = arith.constant 0 : i32
    %c0_i32_0 = arith.constant 0 : i32
    %c0_i32_1 = arith.constant 0 : i32
    return %c0_i32, %c0_i32_0 : i32, i32
  }
  func.func @transform_7(%arg0: i32) -> (i32, i32) {
    %c0_i32 = arith.constant 0 : i32
    %c0_i32_0 = arith.constant 0 : i32
    %c0_i32_1 = arith.constant 0 : i32
    return %c0_i32, %c0_i32_0 : i32, i32
  }
  func.func @transform_8(%arg0: i32) -> i32 {
    %c0_i32 = arith.constant 0 : i32
    %c0_i32_0 = arith.constant 0 : i32
    return %c0_i32 : i32
  }
  func.func @transform_9(%arg0: i32) -> (i32, i32, i32, i32) {
    %c0_i32 = arith.constant 0 : i32
    %c0_i32_0 = arith.constant 0 : i32
    %c0_i32_1 = arith.constant 0 : i32
    %c0_i32_2 = arith.constant 0 : i32
    return %arg0, %c0_i32, %c0_i32_0, %c0_i32_1 : i32, i32, i32, i32
  }
}

</mosaic_0001>

<llo_original>
// kernel: tpu_custom_call.1
$region0: #{tpu_custom_call.1}
  #allocation0 [shape = 'u32[]', space=smem, size = 0x4, offset = 0x4, fixed_abs, tag = 'smem constant byte address 0x4 - core index']
  #allocation1 [shape = 'u32[144,128]{1,0:T(1,128)}', space=vmem, size = 0x12000, scoped, tag = 'internal scratch']
  #allocation2 [shape = 'f32[1]{0:T(128)S(6)}', space=smem, size = 0x200, scoped, tag = 'scoped memory for tpu_custom_call.1']
  %s0 = inlined_call_operand.vmem [shape: bf16[4,10,18,16], index: 0, kind: input, shape index: {}]
  %s1 = inlined_call_operand.vmem [shape: bf16[144,4], index: 1, kind: input, shape index: {}]
  %s2 = inlined_call_operand.vmem [shape: f32[1,4], index: 2, kind: input, shape index: {}]
  %s3 = inlined_call_operand.vmem [shape: f32[1,4], index: 3, kind: input, shape index: {}]
  %s4 = inlined_call_operand.vmem [shape: bf16[4,16], index: 4, kind: input, shape index: {}]
  %s5 = inlined_call_operand.vmem [shape: f32[1,16], index: 5, kind: input, shape index: {}]
  %s6 = inlined_call_operand.vmem [shape: f32[1,16], index: 6, kind: input, shape index: {}]
  %s7 = inlined_call_operand.vmem [shape: bf16[16,16], index: 7, kind: input, shape index: {}]
  %s8 = inlined_call_operand.<no memory space> [shape: f32[1], index: 8, kind: input, shape index: {}]
  %s9 = inlined_call_operand.hbm [shape: f32[4,8,16,16], index: 9, kind: output, shape index: {}]
  %s10 = sld [smem:[#allocation0]]
  $region69: #{tpu_custom_call.1} parent=0
    _
  %s12 = ssub.s32 1, %s10
  %s13 = scalar_select 0, %s12, %s10
  %14 = sst [smem:[#allocation2]] %s8
  $region1: #{tpu_custom_call.1} parent=0
    #allocation3 [shape = 'u8[131072]{0}', space=vmem, size = 0x20000, scoped, tag = 'output window, operand 0']
    #allocation4 [shape = 's32[2]{0}', space=sflag, size = 0x8, scoped, tag = 'scoped memory for tpu_custom_call.1']
    %15 = vsyncpa [#allocation4], 0
    %s16 = scalar_lea.sflag [#allocation4], 1
    %17 = vsyncpa %s16, 0
    loop: start=0, step=1, limit=6
    $region2: #{tpu_custom_call.1} parent=1 // loop_pre_header
      _
    $region3: #{tpu_custom_call.1} parent=1 // loop_header
      %s19 = sphi 0, %s23
      %p20 = scmp.ge.s32.totalorder %s19, 6
      %s29 = sphi 0, %s31
      %s32 = sphi 0, %s29
      %s33 = sphi 0, %s32
      %s49 = sphi 0, %s33
      %s53 = sphi 0, %s53
      %s55 = sphi 0, %s53
      %s56 = sphi 0, %s55
      %s70 = sphi 0, %s56
      %s74 = sphi 0, %s74
      %s76 = sphi 0, %s74
      %s77 = sphi 0, %s76
      %s91 = sphi 0, %s77
      %s95 = sphi 0, %s95
      %s97 = sphi 0, %s95
      %s98 = sphi 0, %s97
      %s112 = sphi 0, %s98
      %s116 = sphi 0, %s116
      %s118 = sphi 0, %s116
      %s119 = sphi 0, %s118
      %s133 = sphi 0, %s119
      %s137 = sphi 0, %s137
      %s139 = sphi 0, %s137
      %s140 = sphi 0, %s139
      %s154 = sphi 0, %s140
      %s158 = sphi 0, %s158
      %s160 = sphi 0, %s158
      %s161 = sphi 0, %s160
      %s175 = sphi 0, %s161
      %s179 = sphi 0, %s179
      %s181 = sphi 0, %s179
      %s182 = sphi 0, %s181
      %s196 = sphi 0, %s182
      %s200 = sphi 0, %s200
      %s202 = sphi 0, %s200
      %s203 = sphi 0, %s202
      %s217 = sphi 0, %s203
      %s223 = sphi 0, %s225
      %s226 = sphi 0, %s223
      %s227 = sphi 0, %s226
      %s243 = sphi 0, %s227
    $region4: #{tpu_custom_call.1} parent=1 // loop_header_branch
      %22 = sbr.rel (%p20) target = $region8
    $region5: #{tpu_custom_call.1} parent=1 // loop_body
      %s24 = ssub.s32 %s19, 1
      %s25 = ssub.s32 %s19, 2
      %s26 = sadd.s32 %s19, 1
      %s27 = ssub.s32 %s19, %s26
      %p28 = scmp.eq.s32.totalorder %s27, 0
      %s30 = sadd.s32 %s29, 1
      %s31 = scalar_select %p28, %s29, %s30
      %p34 = pneg %p28
      %p35 = scmp.eq.s32.totalorder %s19, 3
      %p36 = por %p34, %p35
      %p37 = scmp.ne.s32.totalorder %s29, %s32
      %p38 = scmp.eq.s32.totalorder %s19, 0
      %p39 = por %p37, %p38
      %p40 = scmp.ne.s32.totalorder %s29, %s32
      %p41 = scmp.eq.s32.totalorder %s24, 3
      %p42 = por %p40, %p41
      %p43 = scmp.ne.s32.totalorder %s32, %s33
      %p44 = scmp.eq.s32.totalorder %s24, 0
      %p45 = por %p43, %p44
      %p46 = scmp.ne.s32.totalorder %s32, %s33
      %p47 = scmp.eq.s32.totalorder %s25, 3
      %p48 = por %p46, %p47
      %p50 = scmp.ne.s32.totalorder %s33, %s49
      %p51 = scmp.eq.s32.totalorder %s25, 0
      %p52 = por %p50, %p51
      %s54 = sadd.s32 %s53, 1
      %p57 = scmp.eq.s32.totalorder %s19, 3
      %p58 = scmp.ne.s32.totalorder %s53, %s55
      %p59 = scmp.eq.s32.totalorder %s19, 0
      %p60 = por %p58, %p59
      %p61 = scmp.ne.s32.totalorder %s53, %s55
      %p62 = scmp.eq.s32.totalorder %s24, 3
      %p63 = por %p61, %p62
      %p64 = scmp.ne.s32.totalorder %s55, %s56
      %p65 = scmp.eq.s32.totalorder %s24, 0
      %p66 = por %p64, %p65
      %p67 = scmp.ne.s32.totalorder %s55, %s56
      %p68 = scmp.eq.s32.totalorder %s25, 3
      %p69 = por %p67, %p68
      %p71 = scmp.ne.s32.totalorder %s56, %s70
      %p72 = scmp.eq.s32.totalorder %s25, 0
      %p73 = por %p71, %p72
      %s75 = sadd.s32 %s74, 1
      %p78 = scmp.eq.s32.totalorder %s19, 3
      %p79 = scmp.ne.s32.totalorder %s74, %s76
      %p80 = scmp.eq.s32.totalorder %s19, 0
      %p81 = por %p79, %p80
      %p82 = scmp.ne.s32.totalorder %s74, %s76
      %p83 = scmp.eq.s32.totalorder %s24, 3
      %p84 = por %p82, %p83
      %p85 = scmp.ne.s32.totalorder %s76, %s77
      %p86 = scmp.eq.s32.totalorder %s24, 0
      %p87 = por %p85, %p86
      %p88 = scmp.ne.s32.totalorder %s76, %s77
      %p89 = scmp.eq.s32.totalorder %s25, 3
      %p90 = por %p88, %p89
      %p92 = scmp.ne.s32.totalorder %s77, %s91
      %p93 = scmp.eq.s32.totalorder %s25, 0
      %p94 = por %p92, %p93
      %s96 = sadd.s32 %s95, 1
      %p99 = scmp.eq.s32.totalorder %s19, 3
      %p100 = scmp.ne.s32.totalorder %s95, %s97
      %p101 = scmp.eq.s32.totalorder %s19, 0
      %p102 = por %p100, %p101
      %p103 = scmp.ne.s32.totalorder %s95, %s97
      %p104 = scmp.eq.s32.totalorder %s24, 3
      %p105 = por %p103, %p104
      %p106 = scmp.ne.s32.totalorder %s97, %s98
      %p107 = scmp.eq.s32.totalorder %s24, 0
      %p108 = por %p106, %p107
      %p109 = scmp.ne.s32.totalorder %s97, %s98
      %p110 = scmp.eq.s32.totalorder %s25, 3
      %p111 = por %p109, %p110
      %p113 = scmp.ne.s32.totalorder %s98, %s112
      %p114 = scmp.eq.s32.totalorder %s25, 0
      %p115 = por %p113, %p114
      %s117 = sadd.s32 %s116, 1
      %p120 = scmp.eq.s32.totalorder %s19, 3
      %p121 = scmp.ne.s32.totalorder %s116, %s118
      %p122 = scmp.eq.s32.totalorder %s19, 0
      %p123 = por %p121, %p122
      %p124 = scmp.ne.s32.totalorder %s116, %s118
      %p125 = scmp.eq.s32.totalorder %s24, 3
      %p126 = por %p124, %p125
      %p127 = scmp.ne.s32.totalorder %s118, %s119
      %p128 = scmp.eq.s32.totalorder %s24, 0
      %p129 = por %p127, %p128
      %p130 = scmp.ne.s32.totalorder %s118, %s119
      %p131 = scmp.eq.s32.totalorder %s25, 3
      %p132 = por %p130, %p131
      %p134 = scmp.ne.s32.totalorder %s119, %s133
      %p135 = scmp.eq.s32.totalorder %s25, 0
      %p136 = por %p134, %p135
      %s138 = sadd.s32 %s137, 1
      %p141 = scmp.eq.s32.totalorder %s19, 3
      %p142 = scmp.ne.s32.totalorder %s137, %s139
      %p143 = scmp.eq.s32.totalorder %s19, 0
      %p144 = por %p142, %p143
      %p145 = scmp.ne.s32.totalorder %s137, %s139
      %p146 = scmp.eq.s32.totalorder %s24, 3
      %p147 = por %p145, %p146
      %p148 = scmp.ne.s32.totalorder %s139, %s140
      %p149 = scmp.eq.s32.totalorder %s24, 0
      %p150 = por %p148, %p149
      %p151 = scmp.ne.s32.totalorder %s139, %s140
      %p152 = scmp.eq.s32.totalorder %s25, 3
      %p153 = por %p151, %p152
      %p155 = scmp.ne.s32.totalorder %s140, %s154
      %p156 = scmp.eq.s32.totalorder %s25, 0
      %p157 = por %p155, %p156
      %s159 = sadd.s32 %s158, 1
      %p162 = scmp.eq.s32.totalorder %s19, 3
      %p163 = scmp.ne.s32.totalorder %s158, %s160
      %p164 = scmp.eq.s32.totalorder %s19, 0
      %p165 = por %p163, %p164
      %p166 = scmp.ne.s32.totalorder %s158, %s160
      %p167 = scmp.eq.s32.totalorder %s24, 3
      %p168 = por %p166, %p167
      %p169 = scmp.ne.s32.totalorder %s160, %s161
      %p170 = scmp.eq.s32.totalorder %s24, 0
      %p171 = por %p169, %p170
      %p172 = scmp.ne.s32.totalorder %s160, %s161
      %p173 = scmp.eq.s32.totalorder %s25, 3
      %p174 = por %p172, %p173
      %p176 = scmp.ne.s32.totalorder %s161, %s175
      %p177 = scmp.eq.s32.totalorder %s25, 0
      %p178 = por %p176, %p177
      %s180 = sadd.s32 %s179, 1
      %p183 = scmp.eq.s32.totalorder %s19, 3
      %p184 = scmp.ne.s32.totalorder %s179, %s181
      %p185 = scmp.eq.s32.totalorder %s19, 0
      %p186 = por %p184, %p185
      %p187 = scmp.ne.s32.totalorder %s179, %s181
      %p188 = scmp.eq.s32.totalorder %s24, 3
      %p189 = por %p187, %p188
      %p190 = scmp.ne.s32.totalorder %s181, %s182
      %p191 = scmp.eq.s32.totalorder %s24, 0
      %p192 = por %p190, %p191
      %p193 = scmp.ne.s32.totalorder %s181, %s182
      %p194 = scmp.eq.s32.totalorder %s25, 3
      %p195 = por %p193, %p194
      %p197 = scmp.ne.s32.totalorder %s182, %s196
      %p198 = scmp.eq.s32.totalorder %s25, 0
      %p199 = por %p197, %p198
      %s201 = sadd.s32 %s200, 1
      %p204 = scmp.eq.s32.totalorder %s19, 3
      %p205 = scmp.ne.s32.totalorder %s200, %s202
      %p206 = scmp.eq.s32.totalorder %s19, 0
      %p207 = por %p205, %p206
      %p208 = scmp.ne.s32.totalorder %s200, %s202
      %p209 = scmp.eq.s32.totalorder %s24, 3
      %p210 = por %p208, %p209
      %p211 = scmp.ne.s32.totalorder %s202, %s203
      %p212 = scmp.eq.s32.totalorder %s24, 0
      %p213 = por %p211, %p212
      %p214 = scmp.ne.s32.totalorder %s202, %s203
      %p215 = scmp.eq.s32.totalorder %s25, 3
      %p216 = por %p214, %p215
      %p218 = scmp.ne.s32.totalorder %s203, %s217
      %p219 = scmp.eq.s32.totalorder %s25, 0
      %p220 = por %p218, %p219
      %s221 = ssub.s32 %s19, %s26
      %p222 = scmp.eq.s32.totalorder %s221, 0
      %s224 = sadd.s32 %s223, 1
      %s225 = scalar_select %p222, %s223, %s224
      %p228 = pneg %p222
      %p229 = scmp.eq.s32.totalorder %s19, 3
      %p230 = por %p228, %p229
      %p231 = scmp.ne.s32.totalorder %s223, %s226
      %p232 = scmp.eq.s32.totalorder %s19, 0
      %p233 = por %p231, %p232
      %p234 = scmp.ne.s32.totalorder %s223, %s226
      %p235 = scmp.eq.s32.totalorder %s24, 3
      %p236 = por %p234, %p235
      %p237 = scmp.ne.s32.totalorder %s226, %s227
      %p238 = scmp.eq.s32.totalorder %s24, 0
      %p239 = por %p237, %p238
      %p240 = scmp.ne.s32.totalorder %s226, %s227
      %p241 = scmp.eq.s32.totalorder %s25, 3
      %p242 = por %p240, %p241
      %p244 = scmp.ne.s32.totalorder %s227, %s243
      %p245 = scmp.eq.s32.totalorder %s25, 0
      %p246 = por %p244, %p245
      %p247 = scmp.le.s32.totalorder 1, %s19
      %p248 = scmp.lt.s32.totalorder %s19, 5
      %p249 = pnand %p247, %p248
      %p250 = pneg %p249
      // Predicated region
      $region9: #{tpu_custom_call.1} parent=5 // pred_check
        _
      $region10: #{tpu_custom_call.1} parent=5 // pred_check_branch
        %252 = sbr.rel (%p249) target = $region12
      $region11: #{tpu_custom_call.1} parent=5 // pred_region
        %s253 = ssub.s32 %s19, 1
        // Predicated region
        $region13: #{tpu_custom_call.1} parent=11 // pred_check
          %p254 = pneg %p66
        $region14: #{tpu_custom_call.1} parent=11 // pred_check_branch
          %256 = sbr.rel (%p254) target = $region16
        $region15: #{tpu_custom_call.1} parent=11 // pred_region
          _
        $region16: #{tpu_custom_call.1} parent=11 // pred_fallthru
          _
        // Predicated region
        $region17: #{tpu_custom_call.1} parent=11 // pred_check
          %p257 = pneg %p87
        $region18: #{tpu_custom_call.1} parent=11 // pred_check_branch
          %259 = sbr.rel (%p257) target = $region20
        $region19: #{tpu_custom_call.1} parent=11 // pred_region
          _
        $region20: #{tpu_custom_call.1} parent=11 // pred_fallthru
          _
        // Predicated region
        $region21: #{tpu_custom_call.1} parent=11 // pred_check
          %p260 = pneg %p108
        $region22: #{tpu_custom_call.1} parent=11 // pred_check_branch
          %262 = sbr.rel (%p260) target = $region24
        $region23: #{tpu_custom_call.1} parent=11 // pred_region
          _
        $region24: #{tpu_custom_call.1} parent=11 // pred_fallthru
          _
        // Predicated region
        $region25: #{tpu_custom_call.1} parent=11 // pred_check
          %p263 = pneg %p129
        $region26: #{tpu_custom_call.1} parent=11 // pred_check_branch
          %265 = sbr.rel (%p263) target = $region28
        $region27: #{tpu_custom_call.1} parent=11 // pred_region
          _
        $region28: #{tpu_custom_call.1} parent=11 // pred_fallthru
          _
        // Predicated region
        $region29: #{tpu_custom_call.1} parent=11 // pred_check
          %p266 = pneg %p150
        $region30: #{tpu_custom_call.1} parent=11 // pred_check_branch
          %268 = sbr.rel (%p266) target = $region32
        $region31: #{tpu_custom_call.1} parent=11 // pred_region
          _
        $region32: #{tpu_custom_call.1} parent=11 // pred_fallthru
          _
        // Predicated region
        $region33: #{tpu_custom_call.1} parent=11 // pred_check
          %p269 = pneg %p171
        $region34: #{tpu_custom_call.1} parent=11 // pred_check_branch
          %271 = sbr.rel (%p269) target = $region36
        $region35: #{tpu_custom_call.1} parent=11 // pred_region
          _
        $region36: #{tpu_custom_call.1} parent=11 // pred_fallthru
          _
        // Predicated region
        $region37: #{tpu_custom_call.1} parent=11 // pred_check
          %p272 = pneg %p192
        $region38: #{tpu_custom_call.1} parent=11 // pred_check_branch
          %274 = sbr.rel (%p272) target = $region40
        $region39: #{tpu_custom_call.1} parent=11 // pred_region
          _
        $region40: #{tpu_custom_call.1} parent=11 // pred_fallthru
          _
        // Predicated region
        $region41: #{tpu_custom_call.1} parent=11 // pred_check
          %p275 = pneg %p213
        $region42: #{tpu_custom_call.1} parent=11 // pred_check_branch
          %277 = sbr.rel (%p275) target = $region44
        $region43: #{tpu_custom_call.1} parent=11 // pred_region
          _
        $region44: #{tpu_custom_call.1} parent=11 // pred_fallthru
          _
      $region12: #{tpu_custom_call.1} parent=5 // pred_fallthru
        _
      %p278 = scmp.lt.s32.totalorder %s19, 4
      // Predicated region
      $region45: #{tpu_custom_call.1} parent=5 // pred_check
        %p279 = pneg %p278
      $region46: #{tpu_custom_call.1} parent=5 // pred_check_branch
        %281 = sbr.rel (%p279) target = $region48
      $region47: #{tpu_custom_call.1} parent=5 // pred_region
        // Predicated region
        $region49: #{tpu_custom_call.1} parent=47 // pred_check
          %p282 = pneg %p39
        $region50: #{tpu_custom_call.1} parent=47 // pred_check_branch
          %284 = sbr.rel (%p282) target = $region52
        $region51: #{tpu_custom_call.1} parent=47 // pred_region
          %p285 = scmp.lt.s32.totalorder %s19, 3
          %s286 = scalar_select %p285, %s19, 3
          %s287 = smul.addr %s286, 30
          %s288 = smul.addr %s287, 4
          %s289 = scalar_lea.vmem %s0, %s288
        $region52: #{tpu_custom_call.1} parent=47 // pred_fallthru
          _
      $region48: #{tpu_custom_call.1} parent=5 // pred_fallthru
        _
      %p290 = scmp.le.s32.totalorder 1, %s19
      %p291 = scmp.lt.s32.totalorder %s19, 5
      %p292 = pnand %p290, %p291
      %p293 = pneg %p292
      // Predicated region
      $region53: #{tpu_custom_call.1} parent=5 // pred_check
        _
      $region54: #{tpu_custom_call.1} parent=5 // pred_check_branch
        %295 = sbr.rel (%p292) target = $region56
      $region55: #{tpu_custom_call.1} parent=5 // pred_region
        %s296 = ssub.s32 %s19, 1
        %p297 = scmp.lt.s32.totalorder %s24, 3
        %s298 = scalar_select %p297, %s24, 3
        %s299 = smul.addr %s298, 30
        %s300 = smul.addr %s299, 4
        %s301 = scalar_lea.vmem %s0, %s300
        %p302 = pneg %p45
        %p303 = pneg %p42
        %p304 = pneg %p66
        %p305 = pneg %p63
        %p306 = pneg %p87
        %p307 = pneg %p84
        %p308 = pneg %p108
        %p309 = pneg %p105
        %p310 = pneg %p129
        %p311 = pneg %p126
        %p312 = pneg %p150
        %p313 = pneg %p147
        %p314 = pneg %p171
        %p315 = pneg %p168
        %p316 = pneg %p192
        %p317 = pneg %p189
        %p318 = pneg %p213
        %p319 = pneg %p210
        %p320 = pneg %p239
        %p321 = pneg %p236
        %s322 = sand.u32 %s226, 1
        %s323 = scalar_lea.sflag [#allocation4], %s322
        %s324 = sand.u32 %s226, 1
        %s325 = smul.addr %s324, 128
        %s326 = scalar_lea.vmem [#allocation3], %s325
        %p327 = scmp.lt.s32.totalorder %s24, 3
        %s328 = scalar_select %p327, %s24, 3
        %s329 = smul.addr %s328, 30
        %s330 = smul.addr %s329, 4
        %s331 = scalar_lea.vmem %s0, %s330
        %v333 = vld [vmem:[%s331] sm:$0xf]
        %v334 = vld [vmem:[%s331 + $0x4] sm:$0xf]
        %v335 = vld [vmem:[%s331 + $0x8] sm:$0x1]
        %v336 = vld [vmem:[%s331 + $0xc] sm:$0xf]
        %v337 = vld [vmem:[%s331 + $0x10] sm:$0xf]
        %v338 = vld [vmem:[%s331 + $0x14] sm:$0x1]
        %v339 = vld [vmem:[%s331 + $0x18] sm:$0xf]
        %v340 = vld [vmem:[%s331 + $0x1c] sm:$0xf]
        %v341 = vld [vmem:[%s331 + $0x20] sm:$0x1]
        %v342 = vld [vmem:[%s331 + $0x24] sm:$0xf]
        %v343 = vld [vmem:[%s331 + $0x28] sm:$0xf]
        %v344 = vld [vmem:[%s331 + $0x2c] sm:$0x1]
        %v345 = vld [vmem:[%s331 + $0x30] sm:$0xf]
        %v346 = vld [vmem:[%s331 + $0x34] sm:$0xf]
        %v347 = vld [vmem:[%s331 + $0x38] sm:$0x1]
        %v348 = vld [vmem:[%s331 + $0x3c] sm:$0xf]
        %v349 = vld [vmem:[%s331 + $0x40] sm:$0xf]
        %v350 = vld [vmem:[%s331 + $0x44] sm:$0x1]
        %v351 = vld [vmem:[%s331 + $0x48] sm:$0xf]
        %v352 = vld [vmem:[%s331 + $0x4c] sm:$0xf]
        %v353 = vld [vmem:[%s331 + $0x50] sm:$0x1]
        %v354 = vld [vmem:[%s331 + $0x54] sm:$0xf]
        %v355 = vld [vmem:[%s331 + $0x58] sm:$0xf]
        %v356 = vld [vmem:[%s331 + $0x5c] sm:$0x1]
        %v357 = vld [vmem:[%s331 + $0x60] sm:$0xf]
        %v358 = vld [vmem:[%s331 + $0x64] sm:$0xf]
        %v359 = vld [vmem:[%s331 + $0x68] sm:$0x1]
        %v360 = vld [vmem:[%s331 + $0x6c] sm:$0xf]
        %v361 = vld [vmem:[%s331 + $0x70] sm:$0xf]
        %v362 = vld [vmem:[%s331 + $0x74] sm:$0x1]
        %v379 = vunpack.c.l.b16 %v333
        %v380 = vunpack.c.l.b16 %v334
        %v381 = vunpack.c.l.b16 %v336
        %v382 = vunpack.c.l.b16 %v337
        %v383 = vunpack.c.l.b16 %v339
        %v384 = vunpack.c.l.b16 %v340
        %v385 = vunpack.c.l.b16 %v342
        %v386 = vunpack.c.l.b16 %v343
        %v387 = vunpack.c.l.b16 %v345
        %v388 = vunpack.c.l.b16 %v346
        %v389 = vunpack.c.l.b16 %v348
        %v390 = vunpack.c.l.b16 %v349
        %v391 = vunpack.c.l.b16 %v351
        %v392 = vunpack.c.l.b16 %v352
        %v393 = vunpack.c.l.b16 %v354
        %v394 = vunpack.c.l.b16 %v355
        %v395 = vpack.c.b16 %v380, %v379
        %v396 = vpack.c.b16 %v382, %v381
        %v397 = vpack.c.b16 %v384, %v383
        %v398 = vpack.c.b16 %v386, %v385
        %v399 = vpack.c.b16 %v388, %v387
        %v400 = vpack.c.b16 %v390, %v389
        %v401 = vpack.c.b16 %v392, %v391
        %v402 = vpack.c.b16 %v394, %v393
        %v411 = vunpack.c.l.b16 %v335
        %v412 = vunpack.c.l.b16 %v338
        %v413 = vunpack.c.l.b16 %v341
        %v414 = vunpack.c.l.b16 %v344
        %v415 = vunpack.c.l.b16 %v347
        %v416 = vunpack.c.l.b16 %v350
        %v417 = vunpack.c.l.b16 %v353
        %v418 = vunpack.c.l.b16 %v356
        %v419 = vpack.c.b16 %v411, %v411
        %v420 = vpack.c.b16 %v412, %v412
        %v421 = vpack.c.b16 %v413, %v413
        %v422 = vpack.c.b16 %v414, %v414
        %v423 = vpack.c.b16 %v415, %v415
        %v424 = vpack.c.b16 %v416, %v416
        %v425 = vpack.c.b16 %v417, %v417
        %v426 = vpack.c.b16 %v418, %v418
        %vm427 = vsmask.f32 7424
        %v429 = vshrl.u32 %v395, 16
        %v431 = vshll.u32 %v395, 16
        %v433 = vrot.slane %v431, 1
        %v434 = vor.u32 %v429, %v433
        %v436 = vshll.u32 %v419, 16
        %v438 = vrot.slane %v436, 1
        %v439 = vsel %vm427, %v434, %v438
        %v441 = vshrl.u32 %v396, 16
        %v443 = vshll.u32 %v396, 16
        %v445 = vrot.slane %v443, 1
        %v446 = vor.u32 %v441, %v445
        %v448 = vshll.u32 %v420, 16
        %v450 = vrot.slane %v448, 1
        %v451 = vsel %vm427, %v446, %v450
        %v453 = vshrl.u32 %v397, 16
        %v455 = vshll.u32 %v397, 16
        %v457 = vrot.slane %v455, 1
        %v458 = vor.u32 %v453, %v457
        %v460 = vshll.u32 %v421, 16
        %v462 = vrot.slane %v460, 1
        %v463 = vsel %vm427, %v458, %v462
        %v465 = vshrl.u32 %v398, 16
        %v467 = vshll.u32 %v398, 16
        %v469 = vrot.slane %v467, 1
        %v470 = vor.u32 %v465, %v469
        %v472 = vshll.u32 %v422, 16
        %v474 = vrot.slane %v472, 1
        %v475 = vsel %vm427, %v470, %v474
        %v477 = vshrl.u32 %v399, 16
        %v479 = vshll.u32 %v399, 16
        %v481 = vrot.slane %v479, 1
        %v482 = vor.u32 %v477, %v481
        %v484 = vshll.u32 %v423, 16
        %v486 = vrot.slane %v484, 1
        %v487 = vsel %vm427, %v482, %v486
        %v489 = vshrl.u32 %v400, 16
        %v491 = vshll.u32 %v400, 16
        %v493 = vrot.slane %v491, 1
        %v494 = vor.u32 %v489, %v493
        %v496 = vshll.u32 %v424, 16
        %v498 = vrot.slane %v496, 1
        %v499 = vsel %vm427, %v494, %v498
        %v501 = vshrl.u32 %v401, 16
        %v503 = vshll.u32 %v401, 16
        %v505 = vrot.slane %v503, 1
        %v506 = vor.u32 %v501, %v505
        %v508 = vshll.u32 %v425, 16
        %v510 = vrot.slane %v508, 1
        %v511 = vsel %vm427, %v506, %v510
        %v513 = vshrl.u32 %v402, 16
        %v515 = vshll.u32 %v402, 16
        %v517 = vrot.slane %v515, 1
        %v518 = vor.u32 %v513, %v517
        %v520 = vshll.u32 %v426, 16
        %v522 = vrot.slane %v520, 1
        %v523 = vsel %vm427, %v518, %v522
        %524 = vrot.lane.b32.xlu0 %v439, 16
        %v525 = vpop.permute.xlu0 %524
        %526 = vrot.lane.b32.xlu0 %v451, 16
        %v527 = vpop.permute.xlu0 %526
        %528 = vrot.lane.b32.xlu0 %v463, 16
        %v529 = vpop.permute.xlu0 %528
        %530 = vrot.lane.b32.xlu0 %v475, 16
        %v531 = vpop.permute.xlu0 %530
        %532 = vrot.lane.b32.xlu0 %v487, 16
        %v533 = vpop.permute.xlu0 %532
        %534 = vrot.lane.b32.xlu0 %v499, 16
        %v535 = vpop.permute.xlu0 %534
        %536 = vrot.lane.b32.xlu0 %v511, 16
        %v537 = vpop.permute.xlu0 %536
        %538 = vrot.lane.b32.xlu0 %v523, 16
        %v539 = vpop.permute.xlu0 %538
        %vm540 = vcmask 1046528
        %v541 = vrot.slane %v395, 1
        %v542 = vrot.slane %v419, 1
        %v543 = vsel %vm540, %v541, %v542
        %v544 = vrot.slane %v396, 1
        %v545 = vrot.slane %v420, 1
        %v546 = vsel %vm540, %v544, %v545
        %v547 = vrot.slane %v397, 1
        %v548 = vrot.slane %v421, 1
        %v549 = vsel %vm540, %v547, %v548
        %v550 = vrot.slane %v398, 1
        %v551 = vrot.slane %v422, 1
        %v552 = vsel %vm540, %v550, %v551
        %v553 = vrot.slane %v399, 1
        %v554 = vrot.slane %v423, 1
        %v555 = vsel %vm540, %v553, %v554
        %v556 = vrot.slane %v400, 1
        %v557 = vrot.slane %v424, 1
        %v558 = vsel %vm540, %v556, %v557
        %v559 = vrot.slane %v401, 1
        %v560 = vrot.slane %v425, 1
        %v561 = vsel %vm540, %v559, %v560
        %v562 = vrot.slane %v402, 1
        %v563 = vrot.slane %v426, 1
        %v564 = vsel %vm540, %v562, %v563
        %565 = vrot.lane.b32.xlu0 %v543, 32
        %v566 = vpop.permute.xlu0 %565
        %567 = vrot.lane.b32.xlu0 %v546, 32
        %v568 = vpop.permute.xlu0 %567
        %569 = vrot.lane.b32.xlu0 %v549, 32
        %v570 = vpop.permute.xlu0 %569
        %571 = vrot.lane.b32.xlu0 %v552, 32
        %v572 = vpop.permute.xlu0 %571
        %573 = vrot.lane.b32.xlu0 %v555, 32
        %v574 = vpop.permute.xlu0 %573
        %575 = vrot.lane.b32.xlu0 %v558, 32
        %v576 = vpop.permute.xlu0 %575
        %577 = vrot.lane.b32.xlu0 %v561, 32
        %v578 = vpop.permute.xlu0 %577
        %579 = vrot.lane.b32.xlu0 %v564, 32
        %v580 = vpop.permute.xlu0 %579
        %v583 = vunpack.c.l.b16 %v357
        %v584 = vunpack.c.l.b16 %v358
        %v585 = vpack.c.b16 %v584, %v583
        %586 = vrot.lane.b32.xlu0 %v396, 48
        %v587 = vpop.permute.xlu0 %586
        %588 = vrot.lane.b32.xlu0 %v397, 48
        %v589 = vpop.permute.xlu0 %588
        %590 = vrot.lane.b32.xlu0 %v398, 48
        %v591 = vpop.permute.xlu0 %590
        %592 = vrot.lane.b32.xlu0 %v399, 48
        %v593 = vpop.permute.xlu0 %592
        %594 = vrot.lane.b32.xlu0 %v400, 48
        %v595 = vpop.permute.xlu0 %594
        %596 = vrot.lane.b32.xlu0 %v401, 48
        %v597 = vpop.permute.xlu0 %596
        %598 = vrot.lane.b32.xlu0 %v402, 48
        %v599 = vpop.permute.xlu0 %598
        %600 = vrot.lane.b32.xlu0 %v585, 48
        %v601 = vpop.permute.xlu0 %600
        %v603 = vunpack.c.l.b16 %v359
        %v604 = vpack.c.b16 %v603, %v603
        %v606 = vshrl.u32 %v585, 16
        %v608 = vshll.u32 %v585, 16
        %v610 = vrot.slane %v608, 1
        %v611 = vor.u32 %v606, %v610
        %v613 = vshll.u32 %v604, 16
        %v615 = vrot.slane %v613, 1
        %v616 = vsel %vm427, %v611, %v615
        %617 = vrot.lane.b32.xlu0 %v451, 64
        %v618 = vpop.permute.xlu0 %617
        %619 = vrot.lane.b32.xlu0 %v463, 64
        %v620 = vpop.permute.xlu0 %619
        %621 = vrot.lane.b32.xlu0 %v475, 64
        %v622 = vpop.permute.xlu0 %621
        %623 = vrot.lane.b32.xlu0 %v487, 64
        %v624 = vpop.permute.xlu0 %623
        %625 = vrot.lane.b32.xlu0 %v499, 64
        %v626 = vpop.permute.xlu0 %625
        %627 = vrot.lane.b32.xlu0 %v511, 64
        %v628 = vpop.permute.xlu0 %627
        %629 = vrot.lane.b32.xlu0 %v523, 64
        %v630 = vpop.permute.xlu0 %629
        %631 = vrot.lane.b32.xlu0 %v616, 64
        %v632 = vpop.permute.xlu0 %631
        %v633 = vrot.slane %v585, 1
        %v634 = vrot.slane %v604, 1
        %v635 = vsel %vm540, %v633, %v634
        %636 = vrot.lane.b32.xlu0 %v546, 80
        %v637 = vpop.permute.xlu0 %636
        %638 = vrot.lane.b32.xlu0 %v549, 80
        %v639 = vpop.permute.xlu0 %638
        %640 = vrot.lane.b32.xlu0 %v552, 80
        %v641 = vpop.permute.xlu0 %640
        %642 = vrot.lane.b32.xlu0 %v555, 80
        %v643 = vpop.permute.xlu0 %642
        %644 = vrot.lane.b32.xlu0 %v558, 80
        %v645 = vpop.permute.xlu0 %644
        %646 = vrot.lane.b32.xlu0 %v561, 80
        %v647 = vpop.permute.xlu0 %646
        %648 = vrot.lane.b32.xlu0 %v564, 80
        %v649 = vpop.permute.xlu0 %648
        %650 = vrot.lane.b32.xlu0 %v635, 80
        %v651 = vpop.permute.xlu0 %650
        %v654 = vunpack.c.l.b16 %v360
        %v655 = vunpack.c.l.b16 %v361
        %v656 = vpack.c.b16 %v655, %v654
        %657 = vrot.lane.b32.xlu0 %v397, 96
        %v658 = vpop.permute.xlu0 %657
        %659 = vrot.lane.b32.xlu0 %v398, 96
        %v660 = vpop.permute.xlu0 %659
        %661 = vrot.lane.b32.xlu0 %v399, 96
        %v662 = vpop.permute.xlu0 %661
        %663 = vrot.lane.b32.xlu0 %v400, 96
        %v664 = vpop.permute.xlu0 %663
        %665 = vrot.lane.b32.xlu0 %v401, 96
        %v666 = vpop.permute.xlu0 %665
        %667 = vrot.lane.b32.xlu0 %v402, 96
        %v668 = vpop.permute.xlu0 %667
        %669 = vrot.lane.b32.xlu0 %v585, 96
        %v670 = vpop.permute.xlu0 %669
        %671 = vrot.lane.b32.xlu0 %v656, 96
        %v672 = vpop.permute.xlu0 %671
        %v674 = vunpack.c.l.b16 %v362
        %v675 = vpack.c.b16 %v674, %v674
        %v677 = vshrl.u32 %v656, 16
        %v679 = vshll.u32 %v656, 16
        %v681 = vrot.slane %v679, 1
        %v682 = vor.u32 %v677, %v681
        %v684 = vshll.u32 %v675, 16
        %v686 = vrot.slane %v684, 1
        %v687 = vsel %vm427, %v682, %v686
        %688 = vrot.lane.b32.xlu0 %v463, 112
        %v689 = vpop.permute.xlu0 %688
        %690 = vrot.lane.b32.xlu0 %v475, 112
        %v691 = vpop.permute.xlu0 %690
        %692 = vrot.lane.b32.xlu0 %v487, 112
        %v693 = vpop.permute.xlu0 %692
        %694 = vrot.lane.b32.xlu0 %v499, 112
        %v695 = vpop.permute.xlu0 %694
        %696 = vrot.lane.b32.xlu0 %v511, 112
        %v697 = vpop.permute.xlu0 %696
        %698 = vrot.lane.b32.xlu0 %v523, 112
        %v699 = vpop.permute.xlu0 %698
        %700 = vrot.lane.b32.xlu0 %v616, 112
        %v701 = vpop.permute.xlu0 %700
        %702 = vrot.lane.b32.xlu0 %v687, 112
        %v703 = vpop.permute.xlu0 %702
        %v704 = vrot.slane %v656, 1
        %v705 = vrot.slane %v675, 1
        %v706 = vsel %vm540, %v704, %v705
        %vm707 = vcmask 130048
        %v709 = vsel %vm707, %v395, %v525
        %v711 = vsel %vm707, %v396, %v527
        %v713 = vsel %vm707, %v397, %v529
        %v715 = vsel %vm707, %v398, %v531
        %v717 = vsel %vm707, %v399, %v533
        %v719 = vsel %vm707, %v400, %v535
        %v721 = vsel %vm707, %v401, %v537
        %v723 = vsel %vm707, %v402, %v539
        %vm724 = vcmask 261120
        %v726 = vsel %vm724, %v709, %v566
        %v728 = vsel %vm724, %v711, %v568
        %v730 = vsel %vm724, %v713, %v570
        %v732 = vsel %vm724, %v715, %v572
        %v734 = vsel %vm724, %v717, %v574
        %v736 = vsel %vm724, %v719, %v576
        %v738 = vsel %vm724, %v721, %v578
        %v740 = vsel %vm724, %v723, %v580
        %vm741 = vcmask 392192
        %v743 = vsel %vm741, %v726, %v587
        %v745 = vsel %vm741, %v728, %v589
        %v747 = vsel %vm741, %v730, %v591
        %v749 = vsel %vm741, %v732, %v593
        %v751 = vsel %vm741, %v734, %v595
        %v753 = vsel %vm741, %v736, %v597
        %v755 = vsel %vm741, %v738, %v599
        %v757 = vsel %vm741, %v740, %v601
        %vm758 = vcmask 523264
        %v760 = vsel %vm758, %v743, %v618
        %v762 = vsel %vm758, %v745, %v620
        %v764 = vsel %vm758, %v747, %v622
        %v766 = vsel %vm758, %v749, %v624
        %v768 = vsel %vm758, %v751, %v626
        %v770 = vsel %vm758, %v753, %v628
        %v772 = vsel %vm758, %v755, %v630
        %v774 = vsel %vm758, %v757, %v632
        %vm775 = vcmask 654336
        %v777 = vsel %vm775, %v760, %v637
        %v779 = vsel %vm775, %v762, %v639
        %v781 = vsel %vm775, %v764, %v641
        %v783 = vsel %vm775, %v766, %v643
        %v785 = vsel %vm775, %v768, %v645
        %v787 = vsel %vm775, %v770, %v647
        %v789 = vsel %vm775, %v772, %v649
        %v791 = vsel %vm775, %v774, %v651
        %vm792 = vcmask 785408
        %v794 = vsel %vm792, %v777, %v658
        %v796 = vsel %vm792, %v779, %v660
        %v798 = vsel %vm792, %v781, %v662
        %v800 = vsel %vm792, %v783, %v664
        %v802 = vsel %vm792, %v785, %v666
        %v804 = vsel %vm792, %v787, %v668
        %v806 = vsel %vm792, %v789, %v670
        %v808 = vsel %vm792, %v791, %v672
        %vm809 = vcmask 916480
        %v811 = vsel %vm809, %v794, %v689
        %v814 = vsel %vm809, %v796, %v691
        %v817 = vsel %vm809, %v798, %v693
        %v820 = vsel %vm809, %v800, %v695
        %v823 = vsel %vm809, %v802, %v697
        %v826 = vsel %vm809, %v804, %v699
        %v829 = vsel %vm809, %v806, %v701
        %v832 = vsel %vm809, %v808, %v703
        %v834 = vld [vmem:[%s1] sm:$0xf]
        %v835 = vld [vmem:[%s1 + $0x4] sm:$0xf]
        %v836 = vld [vmem:[%s1 + $0x8] sm:$0xf]
        %v837 = vld [vmem:[%s1 + $0xc] sm:$0xf]
        %v838 = vld [vmem:[%s1 + $0x10] sm:$0xf]
        %v839 = vld [vmem:[%s1 + $0x14] sm:$0xf]
        %v840 = vld [vmem:[%s1 + $0x18] sm:$0xf]
        %v841 = vld [vmem:[%s1 + $0x1c] sm:$0xf]
        %v842 = vld [vmem:[%s1 + $0x20] sm:$0xf]
        %v843 = vld [vmem:[%s1 + $0x24] sm:$0xf]
        %v844 = vld [vmem:[%s1 + $0x28] sm:$0xf]
        %v845 = vld [vmem:[%s1 + $0x2c] sm:$0xf]
        %v846 = vld [vmem:[%s1 + $0x30] sm:$0xf]
        %v847 = vld [vmem:[%s1 + $0x34] sm:$0xf]
        %v848 = vld [vmem:[%s1 + $0x38] sm:$0xf]
        %v849 = vld [vmem:[%s1 + $0x3c] sm:$0xf]
        %v850 = vld [vmem:[%s1 + $0x40] sm:$0xf]
        %v851 = vld [vmem:[%s1 + $0x44] sm:$0xf]
        %v870 = vunpack.c.l.b16 %v834
        %v871 = vunpack.c.l.b16 %v835
        %v872 = vunpack.c.l.b16 %v836
        %v873 = vunpack.c.l.b16 %v837
        %v874 = vunpack.c.l.b16 %v838
        %v875 = vunpack.c.l.b16 %v839
        %v876 = vunpack.c.l.b16 %v840
        %v877 = vunpack.c.l.b16 %v841
        %v878 = vunpack.c.l.b16 %v842
        %v879 = vunpack.c.l.b16 %v843
        %v880 = vunpack.c.l.b16 %v844
        %v881 = vunpack.c.l.b16 %v845
        %v882 = vunpack.c.l.b16 %v846
        %v883 = vunpack.c.l.b16 %v847
        %v884 = vunpack.c.l.b16 %v848
        %v885 = vunpack.c.l.b16 %v849
        %v886 = vunpack.c.l.b16 %v850
        %v887 = vunpack.c.l.b16 %v851
        %v888 = vpack.c.b16 %v871, %v870
        %v889 = vpack.c.b16 %v873, %v872
        %v890 = vpack.c.b16 %v875, %v874
        %v891 = vpack.c.b16 %v877, %v876
        %v892 = vpack.c.b16 %v879, %v878
        %v893 = vpack.c.b16 %v881, %v880
        %v894 = vpack.c.b16 %v883, %v882
        %v895 = vpack.c.b16 %v885, %v884
        %v896 = vpack.c.b16 %v887, %v886
        %v907 = vsel %vm707, %v549, 0
        %v910 = vsel %vm707, %v552, 0
        %v913 = vsel %vm707, %v555, 0
        %v916 = vsel %vm707, %v558, 0
        %v919 = vsel %vm707, %v561, 0
        %v922 = vsel %vm707, %v564, 0
        %v925 = vsel %vm707, %v635, 0
        %v928 = vsel %vm707, %v706, 0
        %930 = vmatprep.subr.bf16.mxu0 0
        %931 = vmatpush1.bf16.msra.mxu0 %v888
        %932 = vmatprep.subr.bf16.mxu0 0
        %933 = vmatpush1.bf16.msra.mxu0 %v889
        %934 = vmatprep.subr.bf16.mxu0 0
        %935 = vmatpush1.bf16.msra.mxu0 %v890
        %936 = vmatprep.subr.bf16.mxu0 0
        %937 = vmatpush1.bf16.msra.mxu0 %v891
        %938 = vmatprep.subr.bf16.mxu0 0
        %939 = vmatpush1.bf16.msra.mxu0 %v892
        %940 = vmatprep.subr.bf16.mxu0 0
        %941 = vmatpush1.bf16.msra.mxu0 %v893
        %942 = vmatprep.subr.bf16.mxu0 0
        %943 = vmatpush1.bf16.msra.mxu0 %v894
        %944 = vmatprep.subr.bf16.mxu0 0
        %945 = vmatpush1.bf16.msra.mxu0 %v895
        %946 = vmatprep.subr.bf16.mxu0 0
        %947 = vmatpush1.bf16.msra.mxu0 %v896
        %948 = vmatprep.subr.bf16.mxu0 0
        %949 = vmatpush1.bf16.msra.mxu0 0
        %950 = vmatprep.subr.bf16.mxu0 0
        %951 = vmatpush1.bf16.msra.mxu0 0
        %952 = vmatprep.subr.bf16.mxu0 0
        %953 = vmatpush1.bf16.msra.mxu0 0
        %954 = vmatprep.subr.bf16.mxu0 0
        %955 = vmatpush1.bf16.msra.mxu0 0
        %956 = vmatprep.subr.bf16.mxu0 0
        %957 = vmatpush1.bf16.msra.mxu0 0
        %958 = vmatprep.subr.bf16.mxu0 0
        %959 = vmatpush1.bf16.msra.mxu0 0
        %960 = vmatprep.subr.bf16.mxu0 0
        %961 = vmatpush1.bf16.msra.mxu0 0
        %962 = vmatprep.mubr.bf16.mxu0 %v907
        %963 = vmatmul.mubr.bf16.gmra.mrb[0].mxu0 %v811
        %v964 = vpop.f32.mrb[0].mxu0
        %v965 = vadd.f32 0.0, %v964
        %v966 = vpop.f32.mrb[0].mxu0
        %v967 = vpop.f32.mrb[0].mxu0
        %v968 = vadd.f32 0.0, %v967
        %v969 = vpop.f32.mrb[0].mxu0
        %970 = vmatprep.mubr.bf16.mxu0 %v910
        %971 = vmatmul.mubr.bf16.gmra.mrb[0].mxu0 %v814
        %v972 = vpop.f32.mrb[0].mxu0
        %v973 = vadd.f32 0.0, %v972
        %v974 = vpop.f32.mrb[0].mxu0
        %v975 = vpop.f32.mrb[0].mxu0
        %v976 = vadd.f32 0.0, %v975
        %v977 = vpop.f32.mrb[0].mxu0
        %978 = vmatprep.mubr.bf16.mxu0 %v913
        %979 = vmatmul.mubr.bf16.gmra.mrb[0].mxu0 %v817
        %v980 = vpop.f32.mrb[0].mxu0
        %v981 = vadd.f32 0.0, %v980
        %v982 = vpop.f32.mrb[0].mxu0
        %v983 = vpop.f32.mrb[0].mxu0
        %v984 = vadd.f32 0.0, %v983
        %v985 = vpop.f32.mrb[0].mxu0
        %986 = vmatprep.mubr.bf16.mxu0 %v916
        %987 = vmatmul.mubr.bf16.gmra.mrb[0].mxu0 %v820
        %v988 = vpop.f32.mrb[0].mxu0
        %v989 = vadd.f32 0.0, %v988
        %v990 = vpop.f32.mrb[0].mxu0
        %v991 = vpop.f32.mrb[0].mxu0
        %v992 = vadd.f32 0.0, %v991
        %v993 = vpop.f32.mrb[0].mxu0
        %994 = vmatprep.mubr.bf16.mxu0 %v919
        %995 = vmatmul.mubr.bf16.gmra.mrb[0].mxu0 %v823
        %v996 = vpop.f32.mrb[0].mxu0
        %v997 = vadd.f32 0.0, %v996
        %v998 = vpop.f32.mrb[0].mxu0
        %v999 = vpop.f32.mrb[0].mxu0
        %v1000 = vadd.f32 0.0, %v999
        %v1001 = vpop.f32.mrb[0].mxu0
        %1002 = vmatprep.mubr.bf16.mxu0 %v922
        %1003 = vmatmul.mubr.bf16.gmra.mrb[0].mxu0 %v826
        %v1004 = vpop.f32.mrb[0].mxu0
        %v1005 = vadd.f32 0.0, %v1004
        %v1006 = vpop.f32.mrb[0].mxu0
        %v1007 = vpop.f32.mrb[0].mxu0
        %v1008 = vadd.f32 0.0, %v1007
        %v1009 = vpop.f32.mrb[0].mxu0
        %1010 = vmatprep.mubr.bf16.mxu0 %v925
        %1011 = vmatmul.mubr.bf16.gmra.mrb[0].mxu0 %v829
        %v1012 = vpop.f32.mrb[0].mxu0
        %v1013 = vadd.f32 0.0, %v1012
        %v1014 = vpop.f32.mrb[0].mxu0
        %v1015 = vpop.f32.mrb[0].mxu0
        %v1016 = vadd.f32 0.0, %v1015
        %v1017 = vpop.f32.mrb[0].mxu0
        %1018 = vmatprep.mubr.bf16.mxu0 %v928
        %1019 = vmatmul.mubr.bf16.gmra.mrb[0].mxu0 %v832
        %v1020 = vpop.f32.mrb[0].mxu0
        %v1021 = vadd.f32 0.0, %v1020
        %v1022 = vpop.f32.mrb[0].mxu0
        %v1023 = vpop.f32.mrb[0].mxu0
        %v1024 = vadd.f32 0.0, %v1023
        %v1025 = vpop.f32.mrb[0].mxu0
        %1026 = vdwg.mxu0
        %v1027 = vld [vmem:[%s2] sm:$0x1]
        %v1029 = vlaneseq
        %v1030 = vshrl.u32 %v1029, 7
        %v1031 = vsub.s32 0, %v1030
        %v1032 = vrot.slane %v1027, %v1031
        %v1034 = vmul.f32 %v965, %v1032
        %v1035 = vmul.f32 %v968, %v1032
        %v1036 = vmul.f32 %v973, %v1032
        %v1037 = vmul.f32 %v976, %v1032
        %v1038 = vmul.f32 %v981, %v1032
        %v1039 = vmul.f32 %v984, %v1032
        %v1040 = vmul.f32 %v989, %v1032
        %v1041 = vmul.f32 %v992, %v1032
        %v1042 = vmul.f32 %v997, %v1032
        %v1043 = vmul.f32 %v1000, %v1032
        %v1044 = vmul.f32 %v1005, %v1032
        %v1045 = vmul.f32 %v1008, %v1032
        %v1046 = vmul.f32 %v1013, %v1032
        %v1047 = vmul.f32 %v1016, %v1032
        %v1048 = vmul.f32 %v1021, %v1032
        %v1049 = vmul.f32 %v1024, %v1032
        %v1050 = vld [vmem:[%s3] sm:$0x1]
        %v1052 = vlaneseq
        %v1053 = vshrl.u32 %v1052, 7
        %v1054 = vsub.s32 0, %v1053
        %v1055 = vrot.slane %v1050, %v1054
        %v1057 = vadd.f32 %v1034, %v1055
        %v1058 = vadd.f32 %v1035, %v1055
        %v1059 = vadd.f32 %v1036, %v1055
        %v1060 = vadd.f32 %v1037, %v1055
        %v1061 = vadd.f32 %v1038, %v1055
        %v1062 = vadd.f32 %v1039, %v1055
        %v1063 = vadd.f32 %v1040, %v1055
        %v1064 = vadd.f32 %v1041, %v1055
        %v1065 = vadd.f32 %v1042, %v1055
        %v1066 = vadd.f32 %v1043, %v1055
        %v1067 = vadd.f32 %v1044, %v1055
        %v1068 = vadd.f32 %v1045, %v1055
        %v1069 = vadd.f32 %v1046, %v1055
        %v1070 = vadd.f32 %v1047, %v1055
        %v1071 = vadd.f32 %v1048, %v1055
        %v1072 = vadd.f32 %v1049, %v1055
        %v1073 = vmax.f32 %v1057, 0.0
        %v1074 = vmax.f32 %v1058, 0.0
        %v1075 = vmax.f32 %v1059, 0.0
        %v1076 = vmax.f32 %v1060, 0.0
        %v1077 = vmax.f32 %v1061, 0.0
        %v1078 = vmax.f32 %v1062, 0.0
        %v1079 = vmax.f32 %v1063, 0.0
        %v1080 = vmax.f32 %v1064, 0.0
        %v1081 = vmax.f32 %v1065, 0.0
        %v1082 = vmax.f32 %v1066, 0.0
        %v1083 = vmax.f32 %v1067, 0.0
        %v1084 = vmax.f32 %v1068, 0.0
        %v1085 = vmax.f32 %v1069, 0.0
        %v1086 = vmax.f32 %v1070, 0.0
        %v1087 = vmax.f32 %v1071, 0.0
        %v1088 = vmax.f32 %v1072, 0.0
        %v1089 = vpack.c.bf16 %v1074, %v1073
        %v1090 = vpack.c.bf16 %v1076, %v1075
        %v1091 = vpack.c.bf16 %v1078, %v1077
        %v1092 = vpack.c.bf16 %v1080, %v1079
        %v1093 = vpack.c.bf16 %v1082, %v1081
        %v1094 = vpack.c.bf16 %v1084, %v1083
        %v1095 = vpack.c.bf16 %v1086, %v1085
        %v1096 = vpack.c.bf16 %v1088, %v1087
        %v1097 = vld [vmem:[%s4] sm:$0x3]
        %vm1098 = vcmask 31744
        %v1100 = vsel %vm1098, %v1089, 0
        %v1103 = vsel %vm1098, %v1090, 0
        %v1106 = vsel %vm1098, %v1091, 0
        %v1109 = vsel %vm1098, %v1092, 0
        %v1112 = vsel %vm1098, %v1093, 0
        %v1115 = vsel %vm1098, %v1094, 0
        %v1118 = vsel %vm1098, %v1095, 0
        %v1121 = vsel %vm1098, %v1096, 0
        %vm1123 = vcmask 1041408
        %v1125 = vsel %vm1123, %v1097, 0
        %1127 = vmatprep.subr.bf16.mxu0 0
        %1128 = vmatpush1.bf16.msra.mxu0 %v1125
        %1129 = vmatprep.subr.bf16.mxu0 0
        %1130 = vmatpush1.bf16.msra.mxu0 0
        %1131 = vmatprep.subr.bf16.mxu0 0
        %1132 = vmatpush1.bf16.msra.mxu0 0
        %1133 = vmatprep.subr.bf16.mxu0 0
        %1134 = vmatpush1.bf16.msra.mxu0 0
        %1135 = vmatprep.subr.bf16.mxu0 0
        %1136 = vmatpush1.bf16.msra.mxu0 0
        %1137 = vmatprep.subr.bf16.mxu0 0
        %1138 = vmatpush1.bf16.msra.mxu0 0
        %1139 = vmatprep.subr.bf16.mxu0 0
        %1140 = vmatpush1.bf16.msra.mxu0 0
        %1141 = vmatprep.subr.bf16.mxu0 0
        %1142 = vmatpush1.bf16.msra.mxu0 0
        %1143 = vmatprep.subr.bf16.mxu0 0
        %1144 = vmatpush1.bf16.msra.mxu0 0
        %1145 = vmatprep.subr.bf16.mxu0 0
        %1146 = vmatpush1.bf16.msra.mxu0 0
        %1147 = vmatprep.subr.bf16.mxu0 0
        %1148 = vmatpush1.bf16.msra.mxu0 0
        %1149 = vmatprep.subr.bf16.mxu0 0
        %1150 = vmatpush1.bf16.msra.mxu0 0
        %1151 = vmatprep.subr.bf16.mxu0 0
        %1152 = vmatpush1.bf16.msra.mxu0 0
        %1153 = vmatprep.subr.bf16.mxu0 0
        %1154 = vmatpush1.bf16.msra.mxu0 0
        %1155 = vmatprep.subr.bf16.mxu0 0
        %1156 = vmatpush1.bf16.msra.mxu0 0
        %1157 = vmatprep.subr.bf16.mxu0 0
        %1158 = vmatpush1.bf16.msra.mxu0 0
        %1159 = vmatprep.mubr.bf16.mxu0 0
        %1160 = vmatmul.mubr.bf16.gmra.mrb[0].mxu0 %v1100
        %v1161 = vpop.f32.mrb[0].mxu0
        %v1162 = vadd.f32 0.0, %v1161
        %v1163 = vpop.f32.mrb[0].mxu0
        %v1164 = vpop.f32.mrb[0].mxu0
        %v1165 = vadd.f32 0.0, %v1164
        %v1166 = vpop.f32.mrb[0].mxu0
        %1167 = vmatprep.mubr.bf16.mxu0 0
        %1168 = vmatmul.mubr.bf16.gmra.mrb[0].mxu0 %v1103
        %v1169 = vpop.f32.mrb[0].mxu0
        %v1170 = vadd.f32 0.0, %v1169
        %v1171 = vpop.f32.mrb[0].mxu0
        %v1172 = vpop.f32.mrb[0].mxu0
        %v1173 = vadd.f32 0.0, %v1172
        %v1174 = vpop.f32.mrb[0].mxu0
        %1175 = vmatprep.mubr.bf16.mxu0 0
        %1176 = vmatmul.mubr.bf16.gmra.mrb[0].mxu0 %v1106
        %v1177 = vpop.f32.mrb[0].mxu0
        %v1178 = vadd.f32 0.0, %v1177
        %v1179 = vpop.f32.mrb[0].mxu0
        %v1180 = vpop.f32.mrb[0].mxu0
        %v1181 = vadd.f32 0.0, %v1180
        %v1182 = vpop.f32.mrb[0].mxu0
        %1183 = vmatprep.mubr.bf16.mxu0 0
        %1184 = vmatmul.mubr.bf16.gmra.mrb[0].mxu0 %v1109
        %v1185 = vpop.f32.mrb[0].mxu0
        %v1186 = vadd.f32 0.0, %v1185
        %v1187 = vpop.f32.mrb[0].mxu0
        %v1188 = vpop.f32.mrb[0].mxu0
        %v1189 = vadd.f32 0.0, %v1188
        %v1190 = vpop.f32.mrb[0].mxu0
        %1191 = vmatprep.mubr.bf16.mxu0 0
        %1192 = vmatmul.mubr.bf16.gmra.mrb[0].mxu0 %v1112
        %v1193 = vpop.f32.mrb[0].mxu0
        %v1194 = vadd.f32 0.0, %v1193
        %v1195 = vpop.f32.mrb[0].mxu0
        %v1196 = vpop.f32.mrb[0].mxu0
        %v1197 = vadd.f32 0.0, %v1196
        %v1198 = vpop.f32.mrb[0].mxu0
        %1199 = vmatprep.mubr.bf16.mxu0 0
        %1200 = vmatmul.mubr.bf16.gmra.mrb[0].mxu0 %v1115
        %v1201 = vpop.f32.mrb[0].mxu0
        %v1202 = vadd.f32 0.0, %v1201
        %v1203 = vpop.f32.mrb[0].mxu0
        %v1204 = vpop.f32.mrb[0].mxu0
        %v1205 = vadd.f32 0.0, %v1204
        %v1206 = vpop.f32.mrb[0].mxu0
        %1207 = vmatprep.mubr.bf16.mxu0 0
        %1208 = vmatmul.mubr.bf16.gmra.mrb[0].mxu0 %v1118
        %v1209 = vpop.f32.mrb[0].mxu0
        %v1210 = vadd.f32 0.0, %v1209
        %v1211 = vpop.f32.mrb[0].mxu0
        %v1212 = vpop.f32.mrb[0].mxu0
        %v1213 = vadd.f32 0.0, %v1212
        %v1214 = vpop.f32.mrb[0].mxu0
        %1215 = vmatprep.mubr.bf16.mxu0 0
        %1216 = vmatmul.mubr.bf16.gmra.mrb[0].mxu0 %v1121
        %v1217 = vpop.f32.mrb[0].mxu0
        %v1218 = vadd.f32 0.0, %v1217
        %v1219 = vpop.f32.mrb[0].mxu0
        %v1220 = vpop.f32.mrb[0].mxu0
        %v1221 = vadd.f32 0.0, %v1220
        %v1222 = vpop.f32.mrb[0].mxu0
        %1223 = vdwg.mxu0
        %v1224 = vld [vmem:[%s5] sm:$0x1]
        %v1226 = vlaneseq
        %v1227 = vshrl.u32 %v1226, 7
        %v1228 = vsub.s32 0, %v1227
        %v1229 = vrot.slane %v1224, %v1228
        %v1231 = vmul.f32 %v1162, %v1229
        %v1232 = vmul.f32 %v1165, %v1229
        %v1233 = vmul.f32 %v1170, %v1229
        %v1234 = vmul.f32 %v1173, %v1229
        %v1235 = vmul.f32 %v1178, %v1229
        %v1236 = vmul.f32 %v1181, %v1229
        %v1237 = vmul.f32 %v1186, %v1229
        %v1238 = vmul.f32 %v1189, %v1229
        %v1239 = vmul.f32 %v1194, %v1229
        %v1240 = vmul.f32 %v1197, %v1229
        %v1241 = vmul.f32 %v1202, %v1229
        %v1242 = vmul.f32 %v1205, %v1229
        %v1243 = vmul.f32 %v1210, %v1229
        %v1244 = vmul.f32 %v1213, %v1229
        %v1245 = vmul.f32 %v1218, %v1229
        %v1246 = vmul.f32 %v1221, %v1229
        %v1247 = vld [vmem:[%s6] sm:$0x1]
        %v1249 = vlaneseq
        %v1250 = vshrl.u32 %v1249, 7
        %v1251 = vsub.s32 0, %v1250
        %v1252 = vrot.slane %v1247, %v1251
        %v1254 = vadd.f32 %v1231, %v1252
        %v1255 = vadd.f32 %v1232, %v1252
        %v1256 = vadd.f32 %v1233, %v1252
        %v1257 = vadd.f32 %v1234, %v1252
        %v1258 = vadd.f32 %v1235, %v1252
        %v1259 = vadd.f32 %v1236, %v1252
        %v1260 = vadd.f32 %v1237, %v1252
        %v1261 = vadd.f32 %v1238, %v1252
        %v1262 = vadd.f32 %v1239, %v1252
        %v1263 = vadd.f32 %v1240, %v1252
        %v1264 = vadd.f32 %v1241, %v1252
        %v1265 = vadd.f32 %v1242, %v1252
        %v1266 = vadd.f32 %v1243, %v1252
        %v1267 = vadd.f32 %v1244, %v1252
        %v1268 = vadd.f32 %v1245, %v1252
        %v1269 = vadd.f32 %v1246, %v1252
        %v1270 = vmax.f32 %v1254, 0.0
        %v1271 = vmax.f32 %v1255, 0.0
        %v1272 = vmax.f32 %v1256, 0.0
        %v1273 = vmax.f32 %v1257, 0.0
        %v1274 = vmax.f32 %v1258, 0.0
        %v1275 = vmax.f32 %v1259, 0.0
        %v1276 = vmax.f32 %v1260, 0.0
        %v1277 = vmax.f32 %v1261, 0.0
        %v1278 = vmax.f32 %v1262, 0.0
        %v1279 = vmax.f32 %v1263, 0.0
        %v1280 = vmax.f32 %v1264, 0.0
        %v1281 = vmax.f32 %v1265, 0.0
        %v1282 = vmax.f32 %v1266, 0.0
        %v1283 = vmax.f32 %v1267, 0.0
        %v1284 = vmax.f32 %v1268, 0.0
        %v1285 = vmax.f32 %v1269, 0.0
        %v1286 = vpack.c.bf16 %v1271, %v1270
        %v1287 = vpack.c.bf16 %v1273, %v1272
        %v1288 = vpack.c.bf16 %v1275, %v1274
        %v1289 = vpack.c.bf16 %v1277, %v1276
        %v1290 = vpack.c.bf16 %v1279, %v1278
        %v1291 = vpack.c.bf16 %v1281, %v1280
        %v1292 = vpack.c.bf16 %v1283, %v1282
        %v1293 = vpack.c.bf16 %v1285, %v1284
        %v1294 = vld [vmem:[%s7] sm:$0xf]
        %v1295 = vld [vmem:[%s7 + $0x4] sm:$0xf]
        %s1296 = sld [smem:[#allocation2]]
        %v1297 = vstv %s1296
        %v1300 = vunpack.c.l.b16 %v1294
        %v1301 = vunpack.c.l.b16 %v1295
        %v1302 = vpack.c.b16 %v1301, %v1300
        %v1305 = vsel %vm707, %v1286, 0
        %v1308 = vsel %vm707, %v1287, 0
        %v1311 = vsel %vm707, %v1288, 0
        %v1314 = vsel %vm707, %v1289, 0
        %v1317 = vsel %vm707, %v1290, 0
        %v1320 = vsel %vm707, %v1291, 0
        %v1323 = vsel %vm707, %v1292, 0
        %v1326 = vsel %vm707, %v1293, 0
        %1328 = vmatprep.subr.bf16.mxu0 0
        %1329 = vmatpush1.bf16.msra.mxu0 %v1302
        %1330 = vmatprep.subr.bf16.mxu0 0
        %1331 = vmatpush1.bf16.msra.mxu0 0
        %1332 = vmatprep.subr.bf16.mxu0 0
        %1333 = vmatpush1.bf16.msra.mxu0 0
        %1334 = vmatprep.subr.bf16.mxu0 0
        %1335 = vmatpush1.bf16.msra.mxu0 0
        %1336 = vmatprep.subr.bf16.mxu0 0
        %1337 = vmatpush1.bf16.msra.mxu0 0
        %1338 = vmatprep.subr.bf16.mxu0 0
        %1339 = vmatpush1.bf16.msra.mxu0 0
        %1340 = vmatprep.subr.bf16.mxu0 0
        %1341 = vmatpush1.bf16.msra.mxu0 0
        %1342 = vmatprep.subr.bf16.mxu0 0
        %1343 = vmatpush1.bf16.msra.mxu0 0
        %1344 = vmatprep.subr.bf16.mxu0 0
        %1345 = vmatpush1.bf16.msra.mxu0 0
        %1346 = vmatprep.subr.bf16.mxu0 0
        %1347 = vmatpush1.bf16.msra.mxu0 0
        %1348 = vmatprep.subr.bf16.mxu0 0
        %1349 = vmatpush1.bf16.msra.mxu0 0
        %1350 = vmatprep.subr.bf16.mxu0 0
        %1351 = vmatpush1.bf16.msra.mxu0 0
        %1352 = vmatprep.subr.bf16.mxu0 0
        %1353 = vmatpush1.bf16.msra.mxu0 0
        %1354 = vmatprep.subr.bf16.mxu0 0
        %1355 = vmatpush1.bf16.msra.mxu0 0
        %1356 = vmatprep.subr.bf16.mxu0 0
        %1357 = vmatpush1.bf16.msra.mxu0 0
        %1358 = vmatprep.subr.bf16.mxu0 0
        %1359 = vmatpush1.bf16.msra.mxu0 0
        %1360 = vmatprep.mubr.bf16.mxu0 0
        %1361 = vmatmul.mubr.bf16.gmra.mrb[0].mxu0 %v1305
        %v1362 = vpop.f32.mrb[0].mxu0
        %v1363 = vadd.f32 %v1297, %v1362
        %v1364 = vpop.f32.mrb[0].mxu0
        %v1365 = vpop.f32.mrb[0].mxu0
        %v1366 = vadd.f32 %v1297, %v1365
        %v1367 = vpop.f32.mrb[0].mxu0
        %1368 = vmatprep.mubr.bf16.mxu0 0
        %1369 = vmatmul.mubr.bf16.gmra.mrb[0].mxu0 %v1308
        %v1370 = vpop.f32.mrb[0].mxu0
        %v1371 = vadd.f32 %v1297, %v1370
        %v1372 = vpop.f32.mrb[0].mxu0
        %v1373 = vpop.f32.mrb[0].mxu0
        %v1374 = vadd.f32 %v1297, %v1373
        %v1375 = vpop.f32.mrb[0].mxu0
        %1376 = vmatprep.mubr.bf16.mxu0 0
        %1377 = vmatmul.mubr.bf16.gmra.mrb[0].mxu0 %v1311
        %v1378 = vpop.f32.mrb[0].mxu0
        %v1379 = vadd.f32 %v1297, %v1378
        %v1380 = vpop.f32.mrb[0].mxu0
        %v1381 = vpop.f32.mrb[0].mxu0
        %v1382 = vadd.f32 %v1297, %v1381
        %v1383 = vpop.f32.mrb[0].mxu0
        %1384 = vmatprep.mubr.bf16.mxu0 0
        %1385 = vmatmul.mubr.bf16.gmra.mrb[0].mxu0 %v1314
        %v1386 = vpop.f32.mrb[0].mxu0
        %v1387 = vadd.f32 %v1297, %v1386
        %v1388 = vpop.f32.mrb[0].mxu0
        %v1389 = vpop.f32.mrb[0].mxu0
        %v1390 = vadd.f32 %v1297, %v1389
        %v1391 = vpop.f32.mrb[0].mxu0
        %1392 = vmatprep.mubr.bf16.mxu0 0
        %1393 = vmatmul.mubr.bf16.gmra.mrb[0].mxu0 %v1317
        %v1394 = vpop.f32.mrb[0].mxu0
        %v1395 = vadd.f32 %v1297, %v1394
        %v1396 = vpop.f32.mrb[0].mxu0
        %v1397 = vpop.f32.mrb[0].mxu0
        %v1398 = vadd.f32 %v1297, %v1397
        %v1399 = vpop.f32.mrb[0].mxu0
        %1400 = vmatprep.mubr.bf16.mxu0 0
        %1401 = vmatmul.mubr.bf16.gmra.mrb[0].mxu0 %v1320
        %v1402 = vpop.f32.mrb[0].mxu0
        %v1403 = vadd.f32 %v1297, %v1402
        %v1404 = vpop.f32.mrb[0].mxu0
        %v1405 = vpop.f32.mrb[0].mxu0
        %v1406 = vadd.f32 %v1297, %v1405
        %v1407 = vpop.f32.mrb[0].mxu0
        %1408 = vmatprep.mubr.bf16.mxu0 0
        %1409 = vmatmul.mubr.bf16.gmra.mrb[0].mxu0 %v1323
        %v1410 = vpop.f32.mrb[0].mxu0
        %v1411 = vadd.f32 %v1297, %v1410
        %v1412 = vpop.f32.mrb[0].mxu0
        %v1413 = vpop.f32.mrb[0].mxu0
        %v1414 = vadd.f32 %v1297, %v1413
        %v1415 = vpop.f32.mrb[0].mxu0
        %1416 = vmatprep.mubr.bf16.mxu0 0
        %1417 = vmatmul.mubr.bf16.gmra.mrb[0].mxu0 %v1326
        %v1418 = vpop.f32.mrb[0].mxu0
        %v1419 = vadd.f32 %v1297, %v1418
        %v1420 = vpop.f32.mrb[0].mxu0
        %v1421 = vpop.f32.mrb[0].mxu0
        %v1422 = vadd.f32 %v1297, %v1421
        %v1423 = vpop.f32.mrb[0].mxu0
        %1424 = vdwg.mxu0
        %v1425 = vxor.u32 %v1363, 2147483648
        %v1426 = vxor.u32 %v1366, 2147483648
        %v1427 = vxor.u32 %v1371, 2147483648
        %v1428 = vxor.u32 %v1374, 2147483648
        %v1429 = vxor.u32 %v1379, 2147483648
        %v1430 = vxor.u32 %v1382, 2147483648
        %v1431 = vxor.u32 %v1387, 2147483648
        %v1432 = vxor.u32 %v1390, 2147483648
        %v1433 = vxor.u32 %v1395, 2147483648
        %v1434 = vxor.u32 %v1398, 2147483648
        %v1435 = vxor.u32 %v1403, 2147483648
        %v1436 = vxor.u32 %v1406, 2147483648
        %v1437 = vxor.u32 %v1411, 2147483648
        %v1438 = vxor.u32 %v1414, 2147483648
        %v1439 = vxor.u32 %v1419, 2147483648
        %v1440 = vxor.u32 %v1422, 2147483648
        %v1441 = vmul.f32 %v1425, 1.442695
        %v1442 = vpow.pop %v1441
        %v1443 = vmul.f32 %v1426, 1.442695
        %v1444 = vpow.pop %v1443
        %v1445 = vmul.f32 %v1427, 1.442695
        %v1446 = vpow.pop %v1445
        %v1447 = vmul.f32 %v1428, 1.442695
        %v1448 = vpow.pop %v1447
        %v1449 = vmul.f32 %v1429, 1.442695
        %v1450 = vpow.pop %v1449
        %v1451 = vmul.f32 %v1430, 1.442695
        %v1452 = vpow.pop %v1451
        %v1453 = vmul.f32 %v1431, 1.442695
        %v1454 = vpow.pop %v1453
        %v1455 = vmul.f32 %v1432, 1.442695
        %v1456 = vpow.pop %v1455
        %v1457 = vmul.f32 %v1433, 1.442695
        %v1458 = vpow.pop %v1457
        %v1459 = vmul.f32 %v1434, 1.442695
        %v1460 = vpow.pop %v1459
        %v1461 = vmul.f32 %v1435, 1.442695
        %v1462 = vpow.pop %v1461
        %v1463 = vmul.f32 %v1436, 1.442695
        %v1464 = vpow.pop %v1463
        %v1465 = vmul.f32 %v1437, 1.442695
        %v1466 = vpow.pop %v1465
        %v1467 = vmul.f32 %v1438, 1.442695
        %v1468 = vpow.pop %v1467
        %v1469 = vmul.f32 %v1439, 1.442695
        %v1470 = vpow.pop %v1469
        %v1471 = vmul.f32 %v1440, 1.442695
        %v1472 = vpow.pop %v1471
        %v1473 = vadd.f32 %v1442, 1.0
        %v1474 = vadd.f32 %v1444, 1.0
        %v1475 = vadd.f32 %v1446, 1.0
        %v1476 = vadd.f32 %v1448, 1.0
        %v1477 = vadd.f32 %v1450, 1.0
        %v1478 = vadd.f32 %v1452, 1.0
        %v1479 = vadd.f32 %v1454, 1.0
        %v1480 = vadd.f32 %v1456, 1.0
        %v1481 = vadd.f32 %v1458, 1.0
        %v1482 = vadd.f32 %v1460, 1.0
        %v1483 = vadd.f32 %v1462, 1.0
        %v1484 = vadd.f32 %v1464, 1.0
        %v1485 = vadd.f32 %v1466, 1.0
        %v1486 = vadd.f32 %v1468, 1.0
        %v1487 = vadd.f32 %v1470, 1.0
        %v1488 = vadd.f32 %v1472, 1.0
        %v1489 = vrcp.pop %v1473
        %v1490 = vmul.f32 1.0, %v1489
        %v1491 = vrcp.pop %v1474
        %v1492 = vmul.f32 1.0, %v1491
        %v1493 = vrcp.pop %v1475
        %v1494 = vmul.f32 1.0, %v1493
        %v1495 = vrcp.pop %v1476
        %v1496 = vmul.f32 1.0, %v1495
        %v1497 = vrcp.pop %v1477
        %v1498 = vmul.f32 1.0, %v1497
        %v1499 = vrcp.pop %v1478
        %v1500 = vmul.f32 1.0, %v1499
        %v1501 = vrcp.pop %v1479
        %v1502 = vmul.f32 1.0, %v1501
        %v1503 = vrcp.pop %v1480
        %v1504 = vmul.f32 1.0, %v1503
        %v1505 = vrcp.pop %v1481
        %v1506 = vmul.f32 1.0, %v1505
        %v1507 = vrcp.pop %v1482
        %v1508 = vmul.f32 1.0, %v1507
        %v1509 = vrcp.pop %v1483
        %v1510 = vmul.f32 1.0, %v1509
        %v1511 = vrcp.pop %v1484
        %v1512 = vmul.f32 1.0, %v1511
        %v1513 = vrcp.pop %v1485
        %v1514 = vmul.f32 1.0, %v1513
        %v1515 = vrcp.pop %v1486
        %v1516 = vmul.f32 1.0, %v1515
        %v1517 = vrcp.pop %v1487
        %v1518 = vmul.f32 1.0, %v1517
        %v1519 = vrcp.pop %v1488
        %v1520 = vmul.f32 1.0, %v1519
        %1521 = vst.msk [vmem:[%s326] sm:$0xff] %vm707, %v1490
        %1522 = vst.msk [vmem:[%s326 + $0x8] sm:$0xff] %vm707, %v1492
        %1523 = vst.msk [vmem:[%s326 + $0x10] sm:$0xff] %vm707, %v1494
        %1524 = vst.msk [vmem:[%s326 + $0x18] sm:$0xff] %vm707, %v1496
        %1525 = vst.msk [vmem:[%s326 + $0x20] sm:$0xff] %vm707, %v1498
        %1526 = vst.msk [vmem:[%s326 + $0x28] sm:$0xff] %vm707, %v1500
        %1527 = vst.msk [vmem:[%s326 + $0x30] sm:$0xff] %vm707, %v1502
        %1528 = vst.msk [vmem:[%s326 + $0x38] sm:$0xff] %vm707, %v1504
        %1529 = vst.msk [vmem:[%s326 + $0x40] sm:$0xff] %vm707, %v1506
        %1530 = vst.msk [vmem:[%s326 + $0x48] sm:$0xff] %vm707, %v1508
        %1531 = vst.msk [vmem:[%s326 + $0x50] sm:$0xff] %vm707, %v1510
        %1532 = vst.msk [vmem:[%s326 + $0x58] sm:$0xff] %vm707, %v1512
        %1533 = vst.msk [vmem:[%s326 + $0x60] sm:$0xff] %vm707, %v1514
        %1534 = vst.msk [vmem:[%s326 + $0x68] sm:$0xff] %vm707, %v1516
        %1535 = vst.msk [vmem:[%s326 + $0x70] sm:$0xff] %vm707, %v1518
        %1536 = vst.msk [vmem:[%s326 + $0x78] sm:$0xff] %vm707, %v1520
        %s1537 = sand.u32 %s226, 1
        %s1538 = scalar_lea.sflag [#allocation4], %s1537
        %s1539 = sand.u32 %s226, 1
        %s1540 = smul.addr %s1539, 128
        %s1541 = scalar_lea.vmem [#allocation3], %s1540
        // Predicated region
        $region57: #{tpu_custom_call.1} parent=55 // pred_check
          %p1542 = pneg %p236
        $region58: #{tpu_custom_call.1} parent=55 // pred_check_branch
          %1544 = sbr.rel (%p1542) target = $region60
        $region59: #{tpu_custom_call.1} parent=55 // pred_region
          %s1546 = ssub.s32 2048, 2048
          %1547 = vsyncadd %s1538, %s1546
          %s1548 = smul.addr %s24, 16
          %s1549 = smul.addr %s1548, 128
          %s1550 = scalar_lea.hbm %s9, %s1549
          %s1551 = sshll.u32 %s1541, 4
          %s1552 = int_to_ptr.vmem [resolvable:$true] %s1551
          %1557 = dma.vmem_to_hbm [thread:$0]  %s1552, 2048, %s1550, %s1538, 128, 128, 8
        $region60: #{tpu_custom_call.1} parent=55 // pred_fallthru
          _
      $region56: #{tpu_custom_call.1} parent=5 // pred_fallthru
        _
      %p1558 = scmp.le.s32.totalorder 2, %s19
      // Predicated region
      $region61: #{tpu_custom_call.1} parent=5 // pred_check
        %p1559 = pneg %p1558
      $region62: #{tpu_custom_call.1} parent=5 // pred_check_branch
        %1561 = sbr.rel (%p1559) target = $region64
      $region63: #{tpu_custom_call.1} parent=5 // pred_region
        %s1562 = ssub.s32 %s19, 2
        // Predicated region
        $region65: #{tpu_custom_call.1} parent=63 // pred_check
          %p1563 = pneg %p242
        $region66: #{tpu_custom_call.1} parent=63 // pred_check_branch
          %1565 = sbr.rel (%p1563) target = $region68
        $region67: #{tpu_custom_call.1} parent=63 // pred_region
          %s1566 = sand.u32 %s227, 1
          %s1567 = scalar_lea.sflag [#allocation4], %s1566
          %s1568 = sand.u32 %s227, 1
          %s1569 = smul.addr %s1568, 128
          %s1570 = scalar_lea.vmem [#allocation3], %s1569
          %1571 = dma.done %s1567, 2048
        $region68: #{tpu_custom_call.1} parent=63 // pred_fallthru
          _
      $region64: #{tpu_custom_call.1} parent=5 // pred_fallthru
        _
    $region6: #{tpu_custom_call.1} parent=1 // loop_footer
      %s23 = sadd.s32 1, %s19
    $region7: #{tpu_custom_call.1} parent=1 // loop_footer_branch
      %18 = sbr.rel target = $region3
    $region8: #{tpu_custom_call.1} parent=1 // loop_exit
      _
    %1572 = vsyncpa [#allocation4], 1
    %s1573 = scalar_lea.sflag [#allocation4], 1
    %1574 = vsyncpa %s1573, 1

</llo_original>
